<compile_context>
chip_gen: v7x
topology: tpu7x:2x2x1
jax: 0.10.0
libtpu: 0.0.40
codegen_flags: <defaults>
</compile_context>

<pallas_src>
import functools
import math

import jax
import jax.numpy as jnp
from jax.experimental import pallas as pl
from jax.experimental.pallas import tpu as pltpu

EPS = 1e-5           # PyTorch BatchNorm1d default
_NUM_CORES = 2       # per-core partial BN stats (v7x megacore); harmless on 1-TC chips


def _round_up(a, b):
    return (a + b - 1) // b * b


def _vmem_limit_bytes():
    # Generation-aware VMEM budget: ~3/4 of physical (96 MiB on v5e/v6e,
    # 48 MiB on v7x), falling back to the conservative 32 MiB scoped default.
    try:
        cap = int(pltpu.get_tpu_info().vmem_capacity_bytes)
        return min(cap * 3 // 4, 100 * 1024 * 1024)
    except Exception:
        return 32 * 1024 * 1024


def _conv3_fused(xb, wcat_ref, lpos, seq_len):
    """Conv1d(kernel_size=3, padding=1, stride=1) as a single MXU matmul.

    xb       : (R, Ci) bf16 tile of whole sequences (R = TN * seq_len)
    wcat_ref : (3*Ci, Co) bf16; taps stacked along K as [w(l-1); w(l); w(l+1)]
    lpos     : (R, 1) int32 position of each row inside its sequence
    Rows shifted across a sequence boundary are masked to zero, so tiles need
    no halo.  (Shifts use static-slice concats; a packed-bf16 sublane
    pltpu.roll is a possible further XLU optimization.)
    """
    zero_row = jnp.zeros((1, xb.shape[1]), xb.dtype)
    zero = jnp.array(0, xb.dtype)
    xm1 = jnp.where(lpos == 0, zero,
                    jnp.concatenate([zero_row, xb[:-1, :]], axis=0))
    xp1 = jnp.where(lpos == seq_len - 1, zero,
                    jnp.concatenate([xb[1:, :], zero_row], axis=0))
    xcat = jnp.concatenate([xm1, xb, xp1], axis=1)             # (R, 3*Ci) bf16
    return jnp.dot(xcat, wcat_ref[...], preferred_element_type=jnp.float32)


# --------------------------------------------------------------------------
# Pass 1: conv1; accumulate bn1 and shortcut-bn statistics (per-core partials).
# --------------------------------------------------------------------------
def _conv1_stats_kernel(x_ref, w1_ref, ws_ref, y1_ref, stats_ref, *, seq_len):
    @pl.when(pl.program_id(1) == 0)
    def _():
        stats_ref[...] = jnp.zeros_like(stats_ref)

    xb = x_ref[...]                                            # (R, Cin_p) bf16
    r = xb.shape[0]
    lpos = jax.lax.broadcasted_iota(jnp.int32, (r, 1), 0) % seq_len

    y1 = _conv3_fused(xb, w1_ref, lpos, seq_len)               # (R, C_p) f32
    ysc = jnp.dot(xb, ws_ref[...], preferred_element_type=jnp.float32)

    y1_ref[...] = y1.astype(y1_ref.dtype)

    # zero-padded rows / channels contribute exactly zero to these sums
    stats_ref[0:4, :] += jnp.concatenate(
        [jnp.sum(y1, axis=0, keepdims=True),
         jnp.sum(y1 * y1, axis=0, keepdims=True),
         jnp.sum(ysc, axis=0, keepdims=True),
         jnp.sum(ysc * ysc, axis=0, keepdims=True)], axis=0)


# --------------------------------------------------------------------------
# Pass 2: bn1 + ReLU + conv2; accumulate bn2 statistics (per-core partials).
# --------------------------------------------------------------------------
def _bn1_conv2_stats_kernel(y1_ref, aff_ref, w2_ref, y2_ref, stats_ref, *,
                            seq_len, true_rows):
    @pl.when(pl.program_id(1) == 0)
    def _():
        stats_ref[...] = jnp.zeros_like(stats_ref)

    h = jnp.maximum(
        y1_ref[...].astype(jnp.float32) * aff_ref[0:1, :] + aff_ref[1:2, :], 0.0)
    hb = h.astype(jnp.bfloat16)                                # cast once

    r = hb.shape[0]
    iota = jax.lax.broadcasted_iota(jnp.int32, (r, 1), 0)
    lpos = iota % seq_len

    y2 = _conv3_fused(hb, w2_ref, lpos, seq_len)
    y2_ref[...] = y2.astype(y2_ref.dtype)

    # exclude batch-padding rows from the bn2 statistics
    tile_idx = pl.program_id(0) * pl.num_programs(1) + pl.program_id(1)
    valid = (tile_idx * r + iota) < true_rows
    y2v = jnp.where(valid, y2, 0.0)
    stats_ref[0:2, :] += jnp.concatenate(
        [jnp.sum(y2v, axis=0, keepdims=True),
         jnp.sum(y2v * y2v, axis=0, keepdims=True)], axis=0)


# --------------------------------------------------------------------------
# Pass 3: bn2 + shortcut (1x1 conv recomputed + bn) + residual add + ReLU.
# --------------------------------------------------------------------------
def _finalize_kernel(y2_ref, x_ref, ws_ref, aff_ref, o_ref):
    # Recompute the 1x1 shortcut from the narrow bf16 input slab instead of
    # storing/reloading a full-width ysc slab (saves a (rows, C_p) write+read).
    ysc = jnp.dot(x_ref[...], ws_ref[...], preferred_element_type=jnp.float32)
    out = y2_ref[...].astype(jnp.float32) * aff_ref[0:1, :] + aff_ref[1:2, :]
    out = out + ysc * aff_ref[2:3, :] + aff_ref[3:4, :]
    o_ref[...] = jnp.maximum(out, 0.0)


# --------------------------------------------------------------------------
# Wrapper
# --------------------------------------------------------------------------
def _plan_tiles(n, seq_len, tile_rows):
    # minimal TN such that TN*seq_len is a multiple of 16 (bf16 sublane tile)
    base = 16 // math.gcd(seq_len, 16)
    tn = base * max(1, tile_rows // (base * seq_len))
    tn = min(tn, _round_up(n, base))
    n_tiles = _round_up(-(-n // tn), _NUM_CORES)   # even #tiles for 2-core split
    return tn, n_tiles * tn, n_tiles


def _bn_affine(s, q, gamma, beta, count):
    # TODO(synk): single-pass E[x^2]-E[x]^2 can lose accuracy for large means;
    # a shifted sum-of-squares would be more robust.
    mean = s / count
    var = jnp.maximum(q / count - mean * mean, 0.0)   # guard tiny negative
    scale = gamma * jax.lax.rsqrt(var + EPS)
    return scale, beta - mean * scale


@functools.partial(jax.jit, static_argnames=("tile_rows",))
def basic_block_forward(x_ncl, params, tile_rows=1024):
    """x_ncl: (N, Cin, L) f32  ->  (N, C, L) f32 (PyTorch NCL semantics)."""
    w1, g1, b1, w2, g2, b2, ws, gs, bs = params
    N, Cin, L = x_ncl.shape
    C = w1.shape[-1]
    bf16 = jnp.bfloat16

    cin_p = _round_up(Cin, 128)
    c_p = _round_up(C, 128)
    tn, n_pad, num_tiles = _plan_tiles(N, L, tile_rows)
    tiles_per_core = num_tiles // _NUM_CORES
    rows_true, rows_pad, tile_r = N * L, n_pad * L, tn * L

    # layout once: NCL -> (rows, C) bf16 slab, channels padded to 128 lanes,
    # batch padded to whole tiles (padding rows are zero -> zero stats).
    x_flat = jnp.transpose(x_ncl, (0, 2, 1)).reshape(rows_true, Cin).astype(bf16)
    x_flat = jnp.pad(x_flat, ((0, rows_pad - rows_true), (0, cin_p - Cin)))

    # conv weights (3, Ci, Co) -> padded -> (3*Ci_p, Co_p): the 3-tap conv
    # becomes one matmul against concat([x[l-1], x[l], x[l+1]], axis=-1).
    w1cat = jnp.pad(w1, ((0, 0), (0, cin_p - Cin), (0, c_p - C))) \
        .astype(bf16).reshape(3 * cin_p, c_p)
    w2cat = jnp.pad(w2, ((0, 0), (0, c_p - C), (0, c_p - C))) \
        .astype(bf16).reshape(3 * c_p, c_p)
    ws_p = jnp.pad(ws, ((0, cin_p - Cin), (0, c_p - C))).astype(bf16)
    pad_c = lambda v: jnp.pad(v, (0, c_p - C))
    g1_p, b1_p, g2_p, b2_p, gs_p, bs_p = map(pad_c, (g1, b1, g2, b2, gs, bs))

    blk = lambda p, i: (p * tiles_per_core + i, 0)
    row_in_spec = pl.BlockSpec((tile_r, cin_p), blk)
    row_spec = pl.BlockSpec((tile_r, c_p), blk)
    stats_spec = pl.BlockSpec((8, c_p), lambda p, i: (p, 0))      # per-core block
    aff_spec = pl.BlockSpec((8, c_p), lambda p, i: (0, 0))
    w1_spec = pl.BlockSpec((3 * cin_p, c_p), lambda p, i: (0, 0))
    w2_spec = pl.BlockSpec((3 * c_p, c_p), lambda p, i: (0, 0))
    ws_spec = pl.BlockSpec((cin_p, c_p), lambda p, i: (0, 0))

    vlim = _vmem_limit_bytes()
    cp12 = pltpu.CompilerParams(dimension_semantics=("parallel", "arbitrary"),
                                vmem_limit_bytes=vlim)
    cp3 = pltpu.CompilerParams(dimension_semantics=("parallel",),
                               vmem_limit_bytes=vlim)

    # ---- pass 1: conv1 + bn1 / shortcut-bn statistics ------------------------
    y1, stats1 = pl.pallas_call(
        functools.partial(_conv1_stats_kernel, seq_len=L),
        grid=(_NUM_CORES, tiles_per_core),
        in_specs=[row_in_spec, w1_spec, ws_spec],
        out_specs=[row_spec, stats_spec],
        out_shape=[jax.ShapeDtypeStruct((rows_pad, c_p), bf16),
                   jax.ShapeDtypeStruct((_NUM_CORES * 8, c_p), jnp.float32)],
        compiler_params=cp12,
    )(x_flat, w1cat, ws_p)
    stats1 = stats1.reshape(_NUM_CORES, 8, c_p).sum(axis=0)   # merge core partials

    count = float(rows_true)
    scale1, shift1 = _bn_affine(stats1[0], stats1[1], g1_p, b1_p, count)
    scale_sc, shift_sc = _bn_affine(stats1[2], stats1[3], gs_p, bs_p, count)
    bn1_aff = jnp.zeros((8, c_p), jnp.float32).at[0].set(scale1).at[1].set(shift1)

    # ---- pass 2: bn1 + ReLU + conv2 + bn2 statistics --------------------------
    y2, stats2 = pl.pallas_call(
        functools.partial(_bn1_conv2_stats_kernel, seq_len=L, true_rows=rows_true),
        grid=(_NUM_CORES, tiles_per_core),
        in_specs=[row_spec, aff_spec, w2_spec],
        out_specs=[row_spec, stats_spec],
        out_shape=[jax.ShapeDtypeStruct((rows_pad, c_p), bf16),
                   jax.ShapeDtypeStruct((_NUM_CORES * 8, c_p), jnp.float32)],
        compiler_params=cp12,
    )(y1, bn1_aff, w2cat)
    stats2 = stats2.reshape(_NUM_CORES, 8, c_p).sum(axis=0)

    scale2, shift2 = _bn_affine(stats2[0], stats2[1], g2_p, b2_p, count)
    bn23_aff = (jnp.zeros((8, c_p), jnp.float32)
                .at[0].set(scale2).at[1].set(shift2)
                .at[2].set(scale_sc).at[3].set(shift_sc))

    # ---- pass 3: bn2 + shortcut(1x1 conv + bn) + residual + ReLU --------------
    out_flat = pl.pallas_call(
        _finalize_kernel,
        grid=(num_tiles,),
        in_specs=[pl.BlockSpec((tile_r, c_p), lambda i: (i, 0)),
                  pl.BlockSpec((tile_r, cin_p), lambda i: (i, 0)),
                  pl.BlockSpec((cin_p, c_p), lambda i: (0, 0)),
                  pl.BlockSpec((8, c_p), lambda i: (0, 0))],
        out_specs=pl.BlockSpec((tile_r, c_p), lambda i: (i, 0)),
        out_shape=jax.ShapeDtypeStruct((rows_pad, c_p), jnp.float32),
        compiler_params=cp3,
    )(y2, x_flat, ws_p, bn23_aff)

    # PyTorch NCL epilogue transpose kept in XLA (returning (N, L, C) directly
    # would save this round trip for a consumer that accepts that layout).
    out = out_flat[:rows_true, :C].reshape(N, L, C)
    return jnp.transpose(out, (0, 2, 1))


# --------------------------------------------------------------------------
# Pure-JAX reference (matches PyTorch BasicBlock.forward in training mode)
# --------------------------------------------------------------------------
def reference_forward(x_ncl, params):
    w1, g1, b1, w2, g2, b2, ws, gs, bs = params

    def conv1d(inp, w_kcico):                      # w: (3, Ci, Co)
        w_oik = jnp.transpose(w_kcico, (2, 1, 0))  # (Co, Ci, K)
        return jax.lax.conv_general_dilated(
            inp, w_oik, window_strides=(1,), padding=((1, 1),),
            dimension_numbers=('NCH', 'OIH', 'NCH'))

    def bn(y, g, b):
        m = jnp.mean(y, axis=(0, 2), keepdims=True)
        v = jnp.mean((y - m) ** 2, axis=(0, 2), keepdims=True)
        return (y - m) * jax.lax.rsqrt(v + EPS) * g[None, :, None] + b[None, :, None]

    out = jnp.maximum(bn(conv1d(x_ncl, w1), g1, b1), 0.0)
    out = bn(conv1d(out, w2), g2, b2)
    sc = bn(jnp.einsum('ncl,cd->ndl', x_ncl, ws), gs, bs)
    return jnp.maximum(out + sc, 0.0)


def init_params(key, inplanes, planes):
    k1, k2, k3 = jax.random.split(key, 3)
    # conv weights stored as (K, Cin, Cout) for the kernel's matmul form
    w1 = jax.random.normal(k1, (3, inplanes, planes), jnp.float32) * 0.2
    w2 = jax.random.normal(k2, (3, planes, planes), jnp.float32) * 0.2
    ws = jax.random.normal(k3, (inplanes, planes), jnp.float32) * 0.2
    g1 = jnp.ones((planes,), jnp.float32); b1 = jnp.zeros((planes,), jnp.float32)
    g2 = jnp.ones((planes,), jnp.float32); b2 = jnp.zeros((planes,), jnp.float32)
    gs = jnp.ones((planes,), jnp.float32); bs = jnp.zeros((planes,), jnp.float32)
    return (w1, g1, b1, w2, g2, b2, ws, gs, bs)


if __name__ == "__main__":
    N, Cin, C, L = 4, 4, 8, 16   # stride=1; Cin != C exercises the conv shortcut
    key = jax.random.PRNGKey(0)
    kx, kp = jax.random.split(key)
    x = jax.random.normal(kx, (N, Cin, L), jnp.float32)
    params = init_params(kp, Cin, C)

    ref = jax.block_until_ready(reference_forward(x, params))
    # tile_rows=32 exercises the multi-tile/2-core stats path;
    # the default exercises the batch-padding path.
    for tr in (32, 1024):
        out = jax.block_until_ready(basic_block_forward(x, params, tile_rows=tr))
        assert out.shape == (N, C, L)
        max_err = float(jnp.max(jnp.abs(out - ref)))
        assert jnp.allclose(out, ref, atol=5e-2, rtol=5e-2), \
            f"tile_rows={tr}: max abs diff {max_err}"
    print("KERNEL_OK")
</pallas_src>

<mosaic_0001>
module attributes {stable_mosaic.version = 11 : i64} {
  func.func @_conv1_stats_kernel(%arg0: i32, %arg1: i32, %arg2: memref<32x128xbf16, #tpu.memory_space<vmem>>, %arg3: memref<384x128xbf16, #tpu.memory_space<vmem>>, %arg4: memref<128x128xbf16, #tpu.memory_space<vmem>>, %arg5: memref<32x128xbf16, #tpu.memory_space<vmem>>, %arg6: memref<8x128xf32, #tpu.memory_space<vmem>>) attributes {dimension_semantics = [#tpu.dimension_semantics<parallel>, #tpu.dimension_semantics<arbitrary>], iteration_bounds = array<i64: 2, 1>, scalar_prefetch = 0 : i64, scratch_operands = 0 : i64, tpu.core_type = #tpu.core_type<tc>, window_params = [{transform_indices = @transform_0, window_bounds = array<i64: 32, 128>}, {pipeline_mode = #tpu.pipeline_mode<synchronous>, transform_indices = @transform_1, window_bounds = array<i64: 384, 128>}, {pipeline_mode = #tpu.pipeline_mode<synchronous>, transform_indices = @transform_2, window_bounds = array<i64: 128, 128>}, {transform_indices = @transform_3, window_bounds = array<i64: 32, 128>}, {transform_indices = @transform_4, window_bounds = array<i64: 8, 128>}]} {
    %c0_i32 = arith.constant 0 : i32
    %0 = arith.cmpi eq, %arg1, %c0_i32 : i32
    %1 = arith.extui %0 : i1 to i32
    %c0_i32_0 = arith.constant 0 : i32
    %2 = arith.cmpi ne, %1, %c0_i32_0 : i32
    scf.if %2 {
      %cst_25 = arith.constant 0.000000e+00 : f32
      %59 = vector.broadcast %cst_25 : f32 to vector<8x128xf32>
      %c0_26 = arith.constant 0 : index
      %c0_27 = arith.constant 0 : index
      %60 = vector.load %arg6[%c0_26, %c0_27] : memref<8x128xf32, #tpu.memory_space<vmem>>, vector<8x128xf32>
      tpu.vector_store %arg6[%c0_26, %c0_27], %59 {strides = array<i32>} : memref<8x128xf32, #tpu.memory_space<vmem>>, vector<8x128xf32>,
    } else {
    }
    %c0 = arith.constant 0 : index
    %c0_1 = arith.constant 0 : index
    %3 = vector.load %arg2[%c0, %c0_1] : memref<32x128xbf16, #tpu.memory_space<vmem>>, vector<32x128xbf16>
    %4 = tpu.iota {dimensions = array<i32: 0>} : vector<32x1xi32>
    %c16_i32 = arith.constant 16 : i32
    %c0_i32_2 = arith.constant 0 : i32
    %5 = arith.cmpi eq, %c16_i32, %c0_i32_2 : i32
    %c1_i32 = arith.constant 1 : i32
    %6 = arith.select %5, %c1_i32, %c16_i32 : i32
    %7 = vector.broadcast %6 : i32 to vector<32x1xi32>
    %8 = arith.remsi %4, %7 : vector<32x1xi32>
    %c0_i32_3 = arith.constant 0 : i32
    %9 = vector.broadcast %c0_i32_3 : i32 to vector<32x1xi32>
    %10 = arith.cmpi ne, %8, %9 : vector<32x1xi32>
    %c0_i32_4 = arith.constant 0 : i32
    %11 = vector.broadcast %c0_i32_4 : i32 to vector<32x1xi32>
    %12 = arith.cmpi slt, %8, %11 : vector<32x1xi32>
    %c0_i32_5 = arith.constant 0 : i32
    %13 = arith.cmpi slt, %6, %c0_i32_5 : i32
    %14 = vector.broadcast %13 : i1 to vector<32x1xi1>
    %15 = vector.broadcast %14 : vector<32x1xi1> to vector<32x1xi1>
    %16 = arith.xori %12, %15 : vector<32x1xi1>
    %17 = arith.andi %16, %10 : vector<32x1xi1>
    %18 = vector.broadcast %6 : i32 to vector<32x1xi32>
    %19 = arith.addi %8, %18 : vector<32x1xi32>
    %20 = arith.select %17, %19, %8 : vector<32x1xi1>, vector<32x1xi32>
    %cst = arith.constant 0.000000e+00 : bf16
    %21 = vector.broadcast %cst : bf16 to vector<1x128xbf16>
    %c0_i32_6 = arith.constant 0 : i32
    %22 = vector.broadcast %c0_i32_6 : i32 to vector<32x1xi32>
    %23 = arith.cmpi eq, %20, %22 : vector<32x1xi32>
    %24 = vector.extract_strided_slice %3 {offsets = [0, 0], sizes = [31, 128], strides = [1, 1]} : vector<32x128xbf16> to vector<31x128xbf16>
    %25 = tpu.concatenate %21, %24 in 0 : vector<1x128xbf16>, vector<31x128xbf16> -> vector<32x128xbf16>
    %cst_7 = arith.constant 0.000000e+00 : bf16
    %26 = vector.shape_cast %23 : vector<32x1xi1> to vector<32x1xi1>
    %27 = vector.broadcast %26 : vector<32x1xi1> to vector<32x128xi1>
    %28 = vector.broadcast %cst_7 : bf16 to vector<32x128xbf16>
    %29 = arith.select %27, %28, %25 : vector<32x128xi1>, vector<32x128xbf16>
    %c15_i32 = arith.constant 15 : i32
    %30 = vector.broadcast %c15_i32 : i32 to vector<32x1xi32>
    %31 = arith.cmpi eq, %20, %30 : vector<32x1xi32>
    %32 = vector.extract_strided_slice %3 {offsets = [1, 0], sizes = [31, 128], strides = [1, 1]} : vector<32x128xbf16> to vector<31x128xbf16>
    %33 = tpu.concatenate %32, %21 in 0 : vector<31x128xbf16>, vector<1x128xbf16> -> vector<32x128xbf16>
    %cst_8 = arith.constant 0.000000e+00 : bf16
    %34 = vector.shape_cast %31 : vector<32x1xi1> to vector<32x1xi1>
    %35 = vector.broadcast %34 : vector<32x1xi1> to vector<32x128xi1>
    %36 = vector.broadcast %cst_8 : bf16 to vector<32x128xbf16>
    %37 = arith.select %35, %36, %33 : vector<32x128xi1>, vector<32x128xbf16>
    %38 = tpu.concatenate %29, %3, %37 in 1 : vector<32x128xbf16>, vector<32x128xbf16>, vector<32x128xbf16> -> vector<32x384xbf16>
    %c0_9 = arith.constant 0 : index
    %c0_10 = arith.constant 0 : index
    %39 = vector.load %arg3[%c0_9, %c0_10] : memref<384x128xbf16, #tpu.memory_space<vmem>>, vector<384x128xbf16>
    %cst_11 = arith.constant dense<0.000000e+00> : vector<32x128xf32>
    %40 = tpu.matmul %38, %39, %cst_11 {dimension_numbers = #tpu.dot_dimension_numbers<[1], [0], [0], [1], [0, 0, 1, 1], [], []>} : vector<32x384xbf16>, vector<384x128xbf16>, vector<32x128xf32> -> vector<32x128xf32>
    %c0_12 = arith.constant 0 : index
    %c0_13 = arith.constant 0 : index
    %41 = vector.load %arg4[%c0_12, %c0_13] : memref<128x128xbf16, #tpu.memory_space<vmem>>, vector<128x128xbf16>
    %cst_14 = arith.constant dense<0.000000e+00> : vector<32x128xf32>
    %42 = tpu.matmul %3, %41, %cst_14 {dimension_numbers = #tpu.dot_dimension_numbers<[1], [0], [0], [1], [0, 0, 1, 1], [], []>} : vector<32x128xbf16>, vector<128x128xbf16>, vector<32x128xf32> -> vector<32x128xf32>
    %43 = arith.truncf %40 : vector<32x128xf32> to vector<32x128xbf16>
    %c0_15 = arith.constant 0 : index
    %c0_16 = arith.constant 0 : index
    %44 = vector.load %arg5[%c0_15, %c0_16] : memref<32x128xbf16, #tpu.memory_space<vmem>>, vector<32x128xbf16>
    tpu.vector_store %arg5[%c0_15, %c0_16], %43 {strides = array<i32>} : memref<32x128xbf16, #tpu.memory_space<vmem>>, vector<32x128xbf16>,
    %c0_17 = arith.constant 0 : index
    %c0_18 = arith.constant 0 : index
    %45 = vector.load %arg6[%c0_17, %c0_18] : memref<8x128xf32, #tpu.memory_space<vmem>>, vector<4x128xf32>
    %cst_19 = arith.constant dense<0.000000e+00> : vector<128xf32>
    %46 = vector.multi_reduction <add>, %40, %cst_19 [0] : vector<32x128xf32> to vector<128xf32>
    %47 = vector.shape_cast %46 : vector<128xf32> to vector<1x128xf32>
    %48 = arith.mulf %40, %40 : vector<32x128xf32>
    %cst_20 = arith.constant dense<0.000000e+00> : vector<128xf32>
    %49 = vector.multi_reduction <add>, %48, %cst_20 [0] : vector<32x128xf32> to vector<128xf32>
    %50 = vector.shape_cast %49 : vector<128xf32> to vector<1x128xf32>
    %cst_21 = arith.constant dense<0.000000e+00> : vector<128xf32>
    %51 = vector.multi_reduction <add>, %42, %cst_21 [0] : vector<32x128xf32> to vector<128xf32>
    %52 = vector.shape_cast %51 : vector<128xf32> to vector<1x128xf32>
    %53 = arith.mulf %42, %42 : vector<32x128xf32>
    %cst_22 = arith.constant dense<0.000000e+00> : vector<128xf32>
    %54 = vector.multi_reduction <add>, %53, %cst_22 [0] : vector<32x128xf32> to vector<128xf32>
    %55 = vector.shape_cast %54 : vector<128xf32> to vector<1x128xf32>
    %56 = tpu.concatenate %47, %50, %52, %55 in 0 : vector<1x128xf32>, vector<1x128xf32>, vector<1x128xf32>, vector<1x128xf32> -> vector<4x128xf32>
    %57 = arith.addf %45, %56 : vector<4x128xf32>
    %c0_23 = arith.constant 0 : index
    %c0_24 = arith.constant 0 : index
    %58 = vector.load %arg6[%c0_23, %c0_24] : memref<8x128xf32, #tpu.memory_space<vmem>>, vector<4x128xf32>
    tpu.vector_store %arg6[%c0_23, %c0_24], %57 {strides = array<i32>} : memref<8x128xf32, #tpu.memory_space<vmem>>, vector<4x128xf32>,
    return
  }
  func.func @transform_0(%arg0: i32, %arg1: i32) -> (i32, i32) {
    %c1_i32 = arith.constant 1 : i32
    %0 = arith.muli %arg0, %c1_i32 : i32
    %1 = arith.addi %0, %arg1 : i32
    %c0_i32 = arith.constant 0 : i32
    %c0_i32_0 = arith.constant 0 : i32
    return %1, %c0_i32 : i32, i32
  }
  func.func @transform_1(%arg0: i32, %arg1: i32) -> (i32, i32) {
    %c0_i32 = arith.constant 0 : i32
    %c0_i32_0 = arith.constant 0 : i32
    %c0_i32_1 = arith.constant 0 : i32
    return %c0_i32, %c0_i32_0 : i32, i32
  }
  func.func @transform_2(%arg0: i32, %arg1: i32) -> (i32, i32) {
    %c0_i32 = arith.constant 0 : i32
    %c0_i32_0 = arith.constant 0 : i32
    %c0_i32_1 = arith.constant 0 : i32
    return %c0_i32, %c0_i32_0 : i32, i32
  }
  func.func @transform_3(%arg0: i32, %arg1: i32) -> (i32, i32) {
    %c1_i32 = arith.constant 1 : i32
    %0 = arith.muli %arg0, %c1_i32 : i32
    %1 = arith.addi %0, %arg1 : i32
    %c0_i32 = arith.constant 0 : i32
    %c0_i32_0 = arith.constant 0 : i32
    return %1, %c0_i32 : i32, i32
  }
  func.func @transform_4(%arg0: i32, %arg1: i32) -> (i32, i32) {
    %c0_i32 = arith.constant 0 : i32
    %c0_i32_0 = arith.constant 0 : i32
    return %arg0, %c0_i32 : i32, i32
  }
}

module attributes {stable_mosaic.version = 11 : i64} {
  func.func @_bn1_conv2_stats_kernel(%arg0: i32, %arg1: i32, %arg2: memref<32x128xbf16, #tpu.memory_space<vmem>>, %arg3: memref<8x128xf32, #tpu.memory_space<vmem>>, %arg4: memref<384x128xbf16, #tpu.memory_space<vmem>>, %arg5: memref<32x128xbf16, #tpu.memory_space<vmem>>, %arg6: memref<8x128xf32, #tpu.memory_space<vmem>>) attributes {dimension_semantics = [#tpu.dimension_semantics<parallel>, #tpu.dimension_semantics<arbitrary>], iteration_bounds = array<i64: 2, 1>, scalar_prefetch = 0 : i64, scratch_operands = 0 : i64, tpu.core_type = #tpu.core_type<tc>, window_params = [{transform_indices = @transform_0, window_bounds = array<i64: 32, 128>}, {pipeline_mode = #tpu.pipeline_mode<synchronous>, transform_indices = @transform_1, window_bounds = array<i64: 8, 128>}, {pipeline_mode = #tpu.pipeline_mode<synchronous>, transform_indices = @transform_2, window_bounds = array<i64: 384, 128>}, {transform_indices = @transform_3, window_bounds = array<i64: 32, 128>}, {transform_indices = @transform_4, window_bounds = array<i64: 8, 128>}]} {
    %c0_i32 = arith.constant 0 : i32
    %0 = arith.cmpi eq, %arg1, %c0_i32 : i32
    %1 = arith.extui %0 : i1 to i32
    %c0_i32_0 = arith.constant 0 : i32
    %2 = arith.cmpi ne, %1, %c0_i32_0 : i32
    scf.if %2 {
      %cst_26 = arith.constant 0.000000e+00 : f32
      %73 = vector.broadcast %cst_26 : f32 to vector<8x128xf32>
      %c0_27 = arith.constant 0 : index
      %c0_28 = arith.constant 0 : index
      %74 = vector.load %arg6[%c0_27, %c0_28] : memref<8x128xf32, #tpu.memory_space<vmem>>, vector<8x128xf32>
      tpu.vector_store %arg6[%c0_27, %c0_28], %73 {strides = array<i32>} : memref<8x128xf32, #tpu.memory_space<vmem>>, vector<8x128xf32>,
    } else {
    }
    %c0 = arith.constant 0 : index
    %c0_1 = arith.constant 0 : index
    %3 = vector.load %arg2[%c0, %c0_1] : memref<32x128xbf16, #tpu.memory_space<vmem>>, vector<32x128xbf16>
    %4 = arith.extf %3 : vector<32x128xbf16> to vector<32x128xf32>
    %c0_2 = arith.constant 0 : index
    %c0_3 = arith.constant 0 : index
    %5 = vector.load %arg3[%c0_2, %c0_3] : memref<8x128xf32, #tpu.memory_space<vmem>>, vector<1x128xf32>
    %6 = vector.broadcast %5 : vector<1x128xf32> to vector<32x128xf32>
    %7 = arith.mulf %4, %6 : vector<32x128xf32>
    %c1 = arith.constant 1 : index
    %c0_4 = arith.constant 0 : index
    %8 = vector.load %arg3[%c1, %c0_4] : memref<8x128xf32, #tpu.memory_space<vmem>>, vector<1x128xf32>
    %9 = vector.broadcast %8 : vector<1x128xf32> to vector<32x128xf32>
    %10 = arith.addf %7, %9 : vector<32x128xf32>
    %cst = arith.constant 0.000000e+00 : f32
    %11 = vector.broadcast %cst : f32 to vector<32x128xf32>
    %12 = arith.maximumf %10, %11 : vector<32x128xf32>
    %13 = arith.truncf %12 : vector<32x128xf32> to vector<32x128xbf16>
    %14 = tpu.iota {dimensions = array<i32: 0>} : vector<32x1xi32>
    %c16_i32 = arith.constant 16 : i32
    %c0_i32_5 = arith.constant 0 : i32
    %15 = arith.cmpi eq, %c16_i32, %c0_i32_5 : i32
    %c1_i32 = arith.constant 1 : i32
    %16 = arith.select %15, %c1_i32, %c16_i32 : i32
    %17 = vector.broadcast %16 : i32 to vector<32x1xi32>
    %18 = arith.remsi %14, %17 : vector<32x1xi32>
    %c0_i32_6 = arith.constant 0 : i32
    %19 = vector.broadcast %c0_i32_6 : i32 to vector<32x1xi32>
    %20 = arith.cmpi ne, %18, %19 : vector<32x1xi32>
    %c0_i32_7 = arith.constant 0 : i32
    %21 = vector.broadcast %c0_i32_7 : i32 to vector<32x1xi32>
    %22 = arith.cmpi slt, %18, %21 : vector<32x1xi32>
    %c0_i32_8 = arith.constant 0 : i32
    %23 = arith.cmpi slt, %16, %c0_i32_8 : i32
    %24 = vector.broadcast %23 : i1 to vector<32x1xi1>
    %25 = vector.broadcast %24 : vector<32x1xi1> to vector<32x1xi1>
    %26 = arith.xori %22, %25 : vector<32x1xi1>
    %27 = arith.andi %26, %20 : vector<32x1xi1>
    %28 = vector.broadcast %16 : i32 to vector<32x1xi32>
    %29 = arith.addi %18, %28 : vector<32x1xi32>
    %30 = arith.select %27, %29, %18 : vector<32x1xi1>, vector<32x1xi32>
    %cst_9 = arith.constant 0.000000e+00 : bf16
    %31 = vector.broadcast %cst_9 : bf16 to vector<1x128xbf16>
    %c0_i32_10 = arith.constant 0 : i32
    %32 = vector.broadcast %c0_i32_10 : i32 to vector<32x1xi32>
    %33 = arith.cmpi eq, %30, %32 : vector<32x1xi32>
    %34 = vector.extract_strided_slice %13 {offsets = [0, 0], sizes = [31, 128], strides = [1, 1]} : vector<32x128xbf16> to vector<31x128xbf16>
    %35 = tpu.concatenate %31, %34 in 0 : vector<1x128xbf16>, vector<31x128xbf16> -> vector<32x128xbf16>
    %cst_11 = arith.constant 0.000000e+00 : bf16
    %36 = vector.shape_cast %33 : vector<32x1xi1> to vector<32x1xi1>
    %37 = vector.broadcast %36 : vector<32x1xi1> to vector<32x128xi1>
    %38 = vector.broadcast %cst_11 : bf16 to vector<32x128xbf16>
    %39 = arith.select %37, %38, %35 : vector<32x128xi1>, vector<32x128xbf16>
    %c15_i32 = arith.constant 15 : i32
    %40 = vector.broadcast %c15_i32 : i32 to vector<32x1xi32>
    %41 = arith.cmpi eq, %30, %40 : vector<32x1xi32>
    %42 = vector.extract_strided_slice %13 {offsets = [1, 0], sizes = [31, 128], strides = [1, 1]} : vector<32x128xbf16> to vector<31x128xbf16>
    %43 = tpu.concatenate %42, %31 in 0 : vector<31x128xbf16>, vector<1x128xbf16> -> vector<32x128xbf16>
    %cst_12 = arith.constant 0.000000e+00 : bf16
    %44 = vector.shape_cast %41 : vector<32x1xi1> to vector<32x1xi1>
    %45 = vector.broadcast %44 : vector<32x1xi1> to vector<32x128xi1>
    %46 = vector.broadcast %cst_12 : bf16 to vector<32x128xbf16>
    %47 = arith.select %45, %46, %43 : vector<32x128xi1>, vector<32x128xbf16>
    %48 = tpu.concatenate %39, %13, %47 in 1 : vector<32x128xbf16>, vector<32x128xbf16>, vector<32x128xbf16> -> vector<32x384xbf16>
    %c0_13 = arith.constant 0 : index
    %c0_14 = arith.constant 0 : index
    %49 = vector.load %arg4[%c0_13, %c0_14] : memref<384x128xbf16, #tpu.memory_space<vmem>>, vector<384x128xbf16>
    %cst_15 = arith.constant dense<0.000000e+00> : vector<32x128xf32>
    %50 = tpu.matmul %48, %49, %cst_15 {dimension_numbers = #tpu.dot_dimension_numbers<[1], [0], [0], [1], [0, 0, 1, 1], [], []>} : vector<32x384xbf16>, vector<384x128xbf16>, vector<32x128xf32> -> vector<32x128xf32>
    %51 = arith.truncf %50 : vector<32x128xf32> to vector<32x128xbf16>
    %c0_16 = arith.constant 0 : index
    %c0_17 = arith.constant 0 : index
    %52 = vector.load %arg5[%c0_16, %c0_17] : memref<32x128xbf16, #tpu.memory_space<vmem>>, vector<32x128xbf16>
    tpu.vector_store %arg5[%c0_16, %c0_17], %51 {strides = array<i32>} : memref<32x128xbf16, #tpu.memory_space<vmem>>, vector<32x128xbf16>,
    %c1_i32_18 = arith.constant 1 : i32
    %53 = arith.muli %arg0, %c1_i32_18 : i32
    %54 = arith.addi %53, %arg1 : i32
    %c32_i32 = arith.constant 32 : i32
    %55 = arith.muli %54, %c32_i32 : i32
    %56 = vector.broadcast %55 : i32 to vector<32x1xi32>
    %57 = arith.addi %56, %14 : vector<32x1xi32>
    %c64_i32 = arith.constant 64 : i32
    %58 = vector.broadcast %c64_i32 : i32 to vector<32x1xi32>
    %59 = arith.cmpi slt, %57, %58 : vector<32x1xi32>
    %cst_19 = arith.constant 0.000000e+00 : f32
    %60 = vector.shape_cast %59 : vector<32x1xi1> to vector<32x1xi1>
    %61 = vector.broadcast %60 : vector<32x1xi1> to vector<32x128xi1>
    %62 = vector.broadcast %cst_19 : f32 to vector<32x128xf32>
    %63 = arith.select %61, %50, %62 : vector<32x128xi1>, vector<32x128xf32>
    %c0_20 = arith.constant 0 : index
    %c0_21 = arith.constant 0 : index
    %64 = vector.load %arg6[%c0_20, %c0_21] : memref<8x128xf32, #tpu.memory_space<vmem>>, vector<2x128xf32>
    %cst_22 = arith.constant dense<0.000000e+00> : vector<128xf32>
    %65 = vector.multi_reduction <add>, %63, %cst_22 [0] : vector<32x128xf32> to vector<128xf32>
    %66 = vector.shape_cast %65 : vector<128xf32> to vector<1x128xf32>
    %67 = arith.mulf %63, %63 : vector<32x128xf32>
    %cst_23 = arith.constant dense<0.000000e+00> : vector<128xf32>
    %68 = vector.multi_reduction <add>, %67, %cst_23 [0] : vector<32x128xf32> to vector<128xf32>
    %69 = vector.shape_cast %68 : vector<128xf32> to vector<1x128xf32>
    %70 = tpu.concatenate %66, %69 in 0 : vector<1x128xf32>, vector<1x128xf32> -> vector<2x128xf32>
    %71 = arith.addf %64, %70 : vector<2x128xf32>
    %c0_24 = arith.constant 0 : index
    %c0_25 = arith.constant 0 : index
    %72 = vector.load %arg6[%c0_24, %c0_25] : memref<8x128xf32, #tpu.memory_space<vmem>>, vector<2x128xf32>
    tpu.vector_store %arg6[%c0_24, %c0_25], %71 {strides = array<i32>} : memref<8x128xf32, #tpu.memory_space<vmem>>, vector<2x128xf32>,
    return
  }
  func.func @transform_0(%arg0: i32, %arg1: i32) -> (i32, i32) {
    %c1_i32 = arith.constant 1 : i32
    %0 = arith.muli %arg0, %c1_i32 : i32
    %1 = arith.addi %0, %arg1 : i32
    %c0_i32 = arith.constant 0 : i32
    %c0_i32_0 = arith.constant 0 : i32
    return %1, %c0_i32 : i32, i32
  }
  func.func @transform_1(%arg0: i32, %arg1: i32) -> (i32, i32) {
    %c0_i32 = arith.constant 0 : i32
    %c0_i32_0 = arith.constant 0 : i32
    %c0_i32_1 = arith.constant 0 : i32
    return %c0_i32, %c0_i32_0 : i32, i32
  }
  func.func @transform_2(%arg0: i32, %arg1: i32) -> (i32, i32) {
    %c0_i32 = arith.constant 0 : i32
    %c0_i32_0 = arith.constant 0 : i32
    %c0_i32_1 = arith.constant 0 : i32
    return %c0_i32, %c0_i32_0 : i32, i32
  }
  func.func @transform_3(%arg0: i32, %arg1: i32) -> (i32, i32) {
    %c1_i32 = arith.constant 1 : i32
    %0 = arith.muli %arg0, %c1_i32 : i32
    %1 = arith.addi %0, %arg1 : i32
    %c0_i32 = arith.constant 0 : i32
    %c0_i32_0 = arith.constant 0 : i32
    return %1, %c0_i32 : i32, i32
  }
  func.func @transform_4(%arg0: i32, %arg1: i32) -> (i32, i32) {
    %c0_i32 = arith.constant 0 : i32
    %c0_i32_0 = arith.constant 0 : i32
    return %arg0, %c0_i32 : i32, i32
  }
}

module attributes {stable_mosaic.version = 11 : i64} {
  func.func @_finalize_kernel(%arg0: i32, %arg1: memref<32x128xbf16, #tpu.memory_space<vmem>>, %arg2: memref<32x128xbf16, #tpu.memory_space<vmem>>, %arg3: memref<128x128xbf16, #tpu.memory_space<vmem>>, %arg4: memref<8x128xf32, #tpu.memory_space<vmem>>, %arg5: memref<32x128xf32, #tpu.memory_space<vmem>>) attributes {dimension_semantics = [#tpu.dimension_semantics<parallel>], iteration_bounds = array<i64: 2>, scalar_prefetch = 0 : i64, scratch_operands = 0 : i64, tpu.core_type = #tpu.core_type<tc>, window_params = [{transform_indices = @transform_0, window_bounds = array<i64: 32, 128>}, {transform_indices = @transform_1, window_bounds = array<i64: 32, 128>}, {pipeline_mode = #tpu.pipeline_mode<synchronous>, transform_indices = @transform_2, window_bounds = array<i64: 128, 128>}, {pipeline_mode = #tpu.pipeline_mode<synchronous>, transform_indices = @transform_3, window_bounds = array<i64: 8, 128>}, {transform_indices = @transform_4, window_bounds = array<i64: 32, 128>}]} {
    %c0 = arith.constant 0 : index
    %c0_0 = arith.constant 0 : index
    %0 = vector.load %arg2[%c0, %c0_0] : memref<32x128xbf16, #tpu.memory_space<vmem>>, vector<32x128xbf16>
    %c0_1 = arith.constant 0 : index
    %c0_2 = arith.constant 0 : index
    %1 = vector.load %arg3[%c0_1, %c0_2] : memref<128x128xbf16, #tpu.memory_space<vmem>>, vector<128x128xbf16>
    %cst = arith.constant dense<0.000000e+00> : vector<32x128xf32>
    %2 = tpu.matmul %0, %1, %cst {dimension_numbers = #tpu.dot_dimension_numbers<[1], [0], [0], [1], [0, 0, 1, 1], [], []>} : vector<32x128xbf16>, vector<128x128xbf16>, vector<32x128xf32> -> vector<32x128xf32>
    %c0_3 = arith.constant 0 : index
    %c0_4 = arith.constant 0 : index
    %3 = vector.load %arg1[%c0_3, %c0_4] : memref<32x128xbf16, #tpu.memory_space<vmem>>, vector<32x128xbf16>
    %4 = arith.extf %3 : vector<32x128xbf16> to vector<32x128xf32>
    %c0_5 = arith.constant 0 : index
    %c0_6 = arith.constant 0 : index
    %5 = vector.load %arg4[%c0_5, %c0_6] : memref<8x128xf32, #tpu.memory_space<vmem>>, vector<1x128xf32>
    %6 = vector.broadcast %5 : vector<1x128xf32> to vector<32x128xf32>
    %7 = arith.mulf %4, %6 : vector<32x128xf32>
    %c1 = arith.constant 1 : index
    %c0_7 = arith.constant 0 : index
    %8 = vector.load %arg4[%c1, %c0_7] : memref<8x128xf32, #tpu.memory_space<vmem>>, vector<1x128xf32>
    %9 = vector.broadcast %8 : vector<1x128xf32> to vector<32x128xf32>
    %10 = arith.addf %7, %9 : vector<32x128xf32>
    %c2 = arith.constant 2 : index
    %c0_8 = arith.constant 0 : index
    %11 = vector.load %arg4[%c2, %c0_8] : memref<8x128xf32, #tpu.memory_space<vmem>>, vector<1x128xf32>
    %12 = vector.broadcast %11 : vector<1x128xf32> to vector<32x128xf32>
    %13 = arith.mulf %2, %12 : vector<32x128xf32>
    %14 = arith.addf %10, %13 : vector<32x128xf32>
    %c3 = arith.constant 3 : index
    %c0_9 = arith.constant 0 : index
    %15 = vector.load %arg4[%c3, %c0_9] : memref<8x128xf32, #tpu.memory_space<vmem>>, vector<1x128xf32>
    %16 = vector.broadcast %15 : vector<1x128xf32> to vector<32x128xf32>
    %17 = arith.addf %14, %16 : vector<32x128xf32>
    %cst_10 = arith.constant 0.000000e+00 : f32
    %18 = vector.broadcast %cst_10 : f32 to vector<32x128xf32>
    %19 = arith.maximumf %17, %18 : vector<32x128xf32>
    %c0_11 = arith.constant 0 : index
    %c0_12 = arith.constant 0 : index
    %20 = vector.load %arg5[%c0_11, %c0_12] : memref<32x128xf32, #tpu.memory_space<vmem>>, vector<32x128xf32>
    tpu.vector_store %arg5[%c0_11, %c0_12], %19 {strides = array<i32>} : memref<32x128xf32, #tpu.memory_space<vmem>>, vector<32x128xf32>,
    return
  }
  func.func @transform_0(%arg0: i32) -> (i32, i32) {
    %c0_i32 = arith.constant 0 : i32
    %c0_i32_0 = arith.constant 0 : i32
    return %arg0, %c0_i32 : i32, i32
  }
  func.func @transform_1(%arg0: i32) -> (i32, i32) {
    %c0_i32 = arith.constant 0 : i32
    %c0_i32_0 = arith.constant 0 : i32
    return %arg0, %c0_i32 : i32, i32
  }
  func.func @transform_2(%arg0: i32) -> (i32, i32) {
    %c0_i32 = arith.constant 0 : i32
    %c0_i32_0 = arith.constant 0 : i32
    %c0_i32_1 = arith.constant 0 : i32
    return %c0_i32, %c0_i32_0 : i32, i32
  }
  func.func @transform_3(%arg0: i32) -> (i32, i32) {
    %c0_i32 = arith.constant 0 : i32
    %c0_i32_0 = arith.constant 0 : i32
    %c0_i32_1 = arith.constant 0 : i32
    return %c0_i32, %c0_i32_0 : i32, i32
  }
  func.func @transform_4(%arg0: i32) -> (i32, i32) {
    %c0_i32 = arith.constant 0 : i32
    %c0_i32_0 = arith.constant 0 : i32
    return %arg0, %c0_i32 : i32, i32
  }
}

</mosaic_0001>

<llo_original>
// kernel: basic_block_forward.5
$region0: #{basic_block_forward.5}
  #allocation0 [shape = 'u32[]', space=smem, size = 0x4, offset = 0x4, fixed_abs, tag = 'smem constant byte address 0x4 - core index']
  #allocation1 [shape = 'u32[144,128]{1,0:T(1,128)}', space=vmem, size = 0x12000, scoped, tag = 'internal scratch']
  %s0 = inlined_call_operand.vmem [shape: bf16[64,128], index: 0, kind: input, shape index: {}]
  %s1 = inlined_call_operand.vmem [shape: bf16[64,128], index: 1, kind: input, shape index: {}]
  %s2 = inlined_call_operand.vmem [shape: bf16[128,128], index: 2, kind: input, shape index: {}]
  %s3 = inlined_call_operand.vmem [shape: f32[8,128], index: 3, kind: input, shape index: {}]
  %s4 = inlined_call_operand.vmem [shape: f32[64,128], index: 4, kind: output, shape index: {}]
  %s5 = sld [smem:[#allocation0]]
  $region49: #{basic_block_forward.5} parent=0
    _
  %s7 = ssub.s32 1, %s5
  %s8 = scalar_select 0, %s7, %s5
  loop: start=0, step=1, limit=4
  $region2: #{basic_block_forward.5} parent=0 // loop_pre_header
    _
  $region3: #{basic_block_forward.5} parent=0 // loop_header
    %s10 = sphi 0, %s14
    %p11 = scmp.ge.s32.totalorder %s10, 4
    %s20 = sphi 0, %s22
    %s23 = sphi 0, %s20
    %s24 = sphi 0, %s23
    %s40 = sphi 0, %s24
    %s46 = sphi 0, %s48
    %s49 = sphi 0, %s46
    %s50 = sphi 0, %s49
    %s66 = sphi 0, %s50
    %s70 = sphi 0, %s70
    %s72 = sphi 0, %s70
    %s73 = sphi 0, %s72
    %s87 = sphi 0, %s73
    %s91 = sphi 0, %s91
    %s93 = sphi 0, %s91
    %s94 = sphi 0, %s93
    %s108 = sphi 0, %s94
    %s114 = sphi 0, %s116
    %s117 = sphi 0, %s114
    %s118 = sphi 0, %s117
    %s134 = sphi 0, %s118
  $region4: #{basic_block_forward.5} parent=0 // loop_header_branch
    %13 = sbr.rel (%p11) target = $region8
  $region5: #{basic_block_forward.5} parent=0 // loop_body
    %s15 = ssub.s32 %s10, 1
    %s16 = ssub.s32 %s10, 2
    %s17 = sadd.s32 %s10, 1
    %s18 = ssub.s32 %s10, %s17
    %p19 = scmp.eq.s32.totalorder %s18, 0
    %s21 = sadd.s32 %s20, 1
    %s22 = scalar_select %p19, %s20, %s21
    %p25 = pneg %p19
    %p26 = scmp.eq.s32.totalorder %s10, 1
    %p27 = por %p25, %p26
    %p28 = scmp.ne.s32.totalorder %s20, %s23
    %p29 = scmp.eq.s32.totalorder %s10, 0
    %p30 = por %p28, %p29
    %p31 = scmp.ne.s32.totalorder %s20, %s23
    %p32 = scmp.eq.s32.totalorder %s15, 1
    %p33 = por %p31, %p32
    %p34 = scmp.ne.s32.totalorder %s23, %s24
    %p35 = scmp.eq.s32.totalorder %s15, 0
    %p36 = por %p34, %p35
    %p37 = scmp.ne.s32.totalorder %s23, %s24
    %p38 = scmp.eq.s32.totalorder %s16, 1
    %p39 = por %p37, %p38
    %p41 = scmp.ne.s32.totalorder %s24, %s40
    %p42 = scmp.eq.s32.totalorder %s16, 0
    %p43 = por %p41, %p42
    %s44 = ssub.s32 %s10, %s17
    %p45 = scmp.eq.s32.totalorder %s44, 0
    %s47 = sadd.s32 %s46, 1
    %s48 = scalar_select %p45, %s46, %s47
    %p51 = pneg %p45
    %p52 = scmp.eq.s32.totalorder %s10, 1
    %p53 = por %p51, %p52
    %p54 = scmp.ne.s32.totalorder %s46, %s49
    %p55 = scmp.eq.s32.totalorder %s10, 0
    %p56 = por %p54, %p55
    %p57 = scmp.ne.s32.totalorder %s46, %s49
    %p58 = scmp.eq.s32.totalorder %s15, 1
    %p59 = por %p57, %p58
    %p60 = scmp.ne.s32.totalorder %s49, %s50
    %p61 = scmp.eq.s32.totalorder %s15, 0
    %p62 = por %p60, %p61
    %p63 = scmp.ne.s32.totalorder %s49, %s50
    %p64 = scmp.eq.s32.totalorder %s16, 1
    %p65 = por %p63, %p64
    %p67 = scmp.ne.s32.totalorder %s50, %s66
    %p68 = scmp.eq.s32.totalorder %s16, 0
    %p69 = por %p67, %p68
    %s71 = sadd.s32 %s70, 1
    %p74 = scmp.eq.s32.totalorder %s10, 1
    %p75 = scmp.ne.s32.totalorder %s70, %s72
    %p76 = scmp.eq.s32.totalorder %s10, 0
    %p77 = por %p75, %p76
    %p78 = scmp.ne.s32.totalorder %s70, %s72
    %p79 = scmp.eq.s32.totalorder %s15, 1
    %p80 = por %p78, %p79
    %p81 = scmp.ne.s32.totalorder %s72, %s73
    %p82 = scmp.eq.s32.totalorder %s15, 0
    %p83 = por %p81, %p82
    %p84 = scmp.ne.s32.totalorder %s72, %s73
    %p85 = scmp.eq.s32.totalorder %s16, 1
    %p86 = por %p84, %p85
    %p88 = scmp.ne.s32.totalorder %s73, %s87
    %p89 = scmp.eq.s32.totalorder %s16, 0
    %p90 = por %p88, %p89
    %s92 = sadd.s32 %s91, 1
    %p95 = scmp.eq.s32.totalorder %s10, 1
    %p96 = scmp.ne.s32.totalorder %s91, %s93
    %p97 = scmp.eq.s32.totalorder %s10, 0
    %p98 = por %p96, %p97
    %p99 = scmp.ne.s32.totalorder %s91, %s93
    %p100 = scmp.eq.s32.totalorder %s15, 1
    %p101 = por %p99, %p100
    %p102 = scmp.ne.s32.totalorder %s93, %s94
    %p103 = scmp.eq.s32.totalorder %s15, 0
    %p104 = por %p102, %p103
    %p105 = scmp.ne.s32.totalorder %s93, %s94
    %p106 = scmp.eq.s32.totalorder %s16, 1
    %p107 = por %p105, %p106
    %p109 = scmp.ne.s32.totalorder %s94, %s108
    %p110 = scmp.eq.s32.totalorder %s16, 0
    %p111 = por %p109, %p110
    %s112 = ssub.s32 %s10, %s17
    %p113 = scmp.eq.s32.totalorder %s112, 0
    %s115 = sadd.s32 %s114, 1
    %s116 = scalar_select %p113, %s114, %s115
    %p119 = pneg %p113
    %p120 = scmp.eq.s32.totalorder %s10, 1
    %p121 = por %p119, %p120
    %p122 = scmp.ne.s32.totalorder %s114, %s117
    %p123 = scmp.eq.s32.totalorder %s10, 0
    %p124 = por %p122, %p123
    %p125 = scmp.ne.s32.totalorder %s114, %s117
    %p126 = scmp.eq.s32.totalorder %s15, 1
    %p127 = por %p125, %p126
    %p128 = scmp.ne.s32.totalorder %s117, %s118
    %p129 = scmp.eq.s32.totalorder %s15, 0
    %p130 = por %p128, %p129
    %p131 = scmp.ne.s32.totalorder %s117, %s118
    %p132 = scmp.eq.s32.totalorder %s16, 1
    %p133 = por %p131, %p132
    %p135 = scmp.ne.s32.totalorder %s118, %s134
    %p136 = scmp.eq.s32.totalorder %s16, 0
    %p137 = por %p135, %p136
    %p138 = scmp.le.s32.totalorder 1, %s10
    %p139 = scmp.lt.s32.totalorder %s10, 3
    %p140 = pnand %p138, %p139
    %p141 = pneg %p140
    // Predicated region
    $region9: #{basic_block_forward.5} parent=5 // pred_check
      _
    $region10: #{basic_block_forward.5} parent=5 // pred_check_branch
      %143 = sbr.rel (%p140) target = $region12
    $region11: #{basic_block_forward.5} parent=5 // pred_region
      %s144 = ssub.s32 %s10, 1
      // Predicated region
      $region13: #{basic_block_forward.5} parent=11 // pred_check
        %p145 = pneg %p83
      $region14: #{basic_block_forward.5} parent=11 // pred_check_branch
        %147 = sbr.rel (%p145) target = $region16
      $region15: #{basic_block_forward.5} parent=11 // pred_region
        _
      $region16: #{basic_block_forward.5} parent=11 // pred_fallthru
        _
      // Predicated region
      $region17: #{basic_block_forward.5} parent=11 // pred_check
        %p148 = pneg %p104
      $region18: #{basic_block_forward.5} parent=11 // pred_check_branch
        %150 = sbr.rel (%p148) target = $region20
      $region19: #{basic_block_forward.5} parent=11 // pred_region
        _
      $region20: #{basic_block_forward.5} parent=11 // pred_fallthru
        _
    $region12: #{basic_block_forward.5} parent=5 // pred_fallthru
      _
    %p151 = scmp.lt.s32.totalorder %s10, 2
    // Predicated region
    $region21: #{basic_block_forward.5} parent=5 // pred_check
      %p152 = pneg %p151
    $region22: #{basic_block_forward.5} parent=5 // pred_check_branch
      %154 = sbr.rel (%p152) target = $region24
    $region23: #{basic_block_forward.5} parent=5 // pred_region
      // Predicated region
      $region25: #{basic_block_forward.5} parent=23 // pred_check
        %p155 = pneg %p30
      $region26: #{basic_block_forward.5} parent=23 // pred_check_branch
        %157 = sbr.rel (%p155) target = $region28
      $region27: #{basic_block_forward.5} parent=23 // pred_region
        %s158 = smul.u32 4, %s10
        %p159 = scmp.lt.s32.totalorder %s158, 7
        %s160 = scalar_select %p159, %s158, 7
        %s161 = smul.addr %s160, 4
        %s162 = scalar_lea.vmem %s0, %s161
        %s163 = smul.u32 4, %s10
      $region28: #{basic_block_forward.5} parent=23 // pred_fallthru
        _
      // Predicated region
      $region29: #{basic_block_forward.5} parent=23 // pred_check
        %p164 = pneg %p56
      $region30: #{basic_block_forward.5} parent=23 // pred_check_branch
        %166 = sbr.rel (%p164) target = $region32
      $region31: #{basic_block_forward.5} parent=23 // pred_region
        %s167 = smul.u32 4, %s10
        %p168 = scmp.lt.s32.totalorder %s167, 7
        %s169 = scalar_select %p168, %s167, 7
        %s170 = smul.addr %s169, 4
        %s171 = scalar_lea.vmem %s1, %s170
        %s172 = smul.u32 4, %s10
      $region32: #{basic_block_forward.5} parent=23 // pred_fallthru
        _
    $region24: #{basic_block_forward.5} parent=5 // pred_fallthru
      _
    %p173 = scmp.le.s32.totalorder 1, %s10
    %p174 = scmp.lt.s32.totalorder %s10, 3
    %p175 = pnand %p173, %p174
    %p176 = pneg %p175
    // Predicated region
    $region33: #{basic_block_forward.5} parent=5 // pred_check
      _
    $region34: #{basic_block_forward.5} parent=5 // pred_check_branch
      %178 = sbr.rel (%p175) target = $region36
    $region35: #{basic_block_forward.5} parent=5 // pred_region
      %s179 = ssub.s32 %s10, 1
      %s180 = smul.u32 4, %s15
      %p181 = scmp.lt.s32.totalorder %s180, 7
      %s182 = scalar_select %p181, %s180, 7
      %s183 = smul.addr %s182, 4
      %s184 = scalar_lea.vmem %s0, %s183
      %p185 = pneg %p36
      %p186 = pneg %p33
      %s187 = smul.u32 4, %s15
      %p188 = scmp.lt.s32.totalorder %s187, 7
      %s189 = scalar_select %p188, %s187, 7
      %s190 = smul.addr %s189, 4
      %s191 = scalar_lea.vmem %s1, %s190
      %p192 = pneg %p62
      %p193 = pneg %p59
      %p194 = pneg %p83
      %p195 = pneg %p80
      %p196 = pneg %p104
      %p197 = pneg %p101
      %p198 = pneg %p130
      %p199 = pneg %p127
      %s200 = smul.u32 4, %s15
      %p201 = scmp.lt.s32.totalorder %s200, 7
      %s202 = scalar_select %p201, %s200, 7
      %s203 = smul.addr %s202, 8
      %s204 = scalar_lea.vmem %s4, %s203
      %s205 = smul.u32 4, %s15
      %p206 = scmp.lt.s32.totalorder %s205, 7
      %s207 = scalar_select %p206, %s205, 7
      %s208 = smul.addr %s207, 4
      %s209 = scalar_lea.vmem %s0, %s208
      %s210 = smul.u32 4, %s15
      %s211 = smul.u32 4, %s15
      %p212 = scmp.lt.s32.totalorder %s211, 7
      %s213 = scalar_select %p212, %s211, 7
      %s214 = smul.addr %s213, 4
      %s215 = scalar_lea.vmem %s1, %s214
      %s216 = smul.u32 4, %s15
      %s217 = smul.u32 4, %s15
      %p218 = scmp.lt.s32.totalorder %s217, 7
      %s219 = scalar_select %p218, %s217, 7
      %s220 = smul.addr %s219, 8
      %s221 = scalar_lea.vmem %s4, %s220
      %s222 = smul.u32 4, %s15
      %v224 = vld [vmem:[%s215] sm:$0xf]
      %v225 = vld [vmem:[%s215 + $0x4] sm:$0xf]
      %v226 = vld [vmem:[%s215 + $0x8] sm:$0xf]
      %v227 = vld [vmem:[%s215 + $0xc] sm:$0xf]
      %v228 = vld [vmem:[%s2] sm:$0xf]
      %v229 = vld [vmem:[%s2 + $0x4] sm:$0xf]
      %v230 = vld [vmem:[%s2 + $0x8] sm:$0xf]
      %v231 = vld [vmem:[%s2 + $0xc] sm:$0xf]
      %v232 = vld [vmem:[%s2 + $0x10] sm:$0xf]
      %v233 = vld [vmem:[%s2 + $0x14] sm:$0xf]
      %v234 = vld [vmem:[%s2 + $0x18] sm:$0xf]
      %v235 = vld [vmem:[%s2 + $0x1c] sm:$0xf]
      %v236 = vld [vmem:[%s2 + $0x20] sm:$0xf]
      %v237 = vld [vmem:[%s2 + $0x24] sm:$0xf]
      %v238 = vld [vmem:[%s2 + $0x28] sm:$0xf]
      %v239 = vld [vmem:[%s2 + $0x2c] sm:$0xf]
      %v240 = vld [vmem:[%s2 + $0x30] sm:$0xf]
      %v241 = vld [vmem:[%s2 + $0x34] sm:$0xf]
      %v242 = vld [vmem:[%s2 + $0x38] sm:$0xf]
      %v243 = vld [vmem:[%s2 + $0x3c] sm:$0xf]
      %v248 = vunpack.c.l.b16 %v224
      %v249 = vunpack.c.l.b16 %v225
      %v250 = vunpack.c.l.b16 %v226
      %v251 = vunpack.c.l.b16 %v227
      %v252 = vpack.c.b16 %v249, %v248
      %v253 = vpack.c.b16 %v251, %v250
      %v272 = vunpack.c.l.b16 %v228
      %v273 = vunpack.c.l.b16 %v229
      %v274 = vunpack.c.l.b16 %v230
      %v275 = vunpack.c.l.b16 %v231
      %v276 = vunpack.c.l.b16 %v232
      %v277 = vunpack.c.l.b16 %v233
      %v278 = vunpack.c.l.b16 %v234
      %v279 = vunpack.c.l.b16 %v235
      %v280 = vunpack.c.l.b16 %v236
      %v281 = vunpack.c.l.b16 %v237
      %v282 = vunpack.c.l.b16 %v238
      %v283 = vunpack.c.l.b16 %v239
      %v284 = vunpack.c.l.b16 %v240
      %v285 = vunpack.c.l.b16 %v241
      %v286 = vunpack.c.l.b16 %v242
      %v287 = vunpack.c.l.b16 %v243
      %v288 = vpack.c.b16 %v273, %v272
      %v289 = vpack.c.b16 %v275, %v274
      %v290 = vpack.c.b16 %v277, %v276
      %v291 = vpack.c.b16 %v279, %v278
      %v292 = vpack.c.b16 %v281, %v280
      %v293 = vpack.c.b16 %v283, %v282
      %v294 = vpack.c.b16 %v285, %v284
      %v295 = vpack.c.b16 %v287, %v286
      %304 = vmatprep.subr.bf16.mxu0 0
      %305 = vmatpush1.bf16.msra.mxu0 %v288
      %306 = vmatprep.subr.bf16.mxu0 0
      %307 = vmatpush1.bf16.msra.mxu0 %v289
      %308 = vmatprep.subr.bf16.mxu0 0
      %309 = vmatpush1.bf16.msra.mxu0 %v290
      %310 = vmatprep.subr.bf16.mxu0 0
      %311 = vmatpush1.bf16.msra.mxu0 %v291
      %312 = vmatprep.subr.bf16.mxu0 0
      %313 = vmatpush1.bf16.msra.mxu0 %v292
      %314 = vmatprep.subr.bf16.mxu0 0
      %315 = vmatpush1.bf16.msra.mxu0 %v293
      %316 = vmatprep.subr.bf16.mxu0 0
      %317 = vmatpush1.bf16.msra.mxu0 %v294
      %318 = vmatprep.subr.bf16.mxu0 0
      %319 = vmatpush1.bf16.msra.mxu0 %v295
      %320 = vmatprep.subr.bf16.mxu0 0
      %321 = vmatpush1.bf16.msra.mxu0 0
      %322 = vmatprep.subr.bf16.mxu0 0
      %323 = vmatpush1.bf16.msra.mxu0 0
      %324 = vmatprep.subr.bf16.mxu0 0
      %325 = vmatpush1.bf16.msra.mxu0 0
      %326 = vmatprep.subr.bf16.mxu0 0
      %327 = vmatpush1.bf16.msra.mxu0 0
      %328 = vmatprep.subr.bf16.mxu0 0
      %329 = vmatpush1.bf16.msra.mxu0 0
      %330 = vmatprep.subr.bf16.mxu0 0
      %331 = vmatpush1.bf16.msra.mxu0 0
      %332 = vmatprep.subr.bf16.mxu0 0
      %333 = vmatpush1.bf16.msra.mxu0 0
      %334 = vmatprep.subr.bf16.mxu0 0
      %335 = vmatpush1.bf16.msra.mxu0 0
      %336 = vmatprep.mubr.bf16.mxu0 0
      %337 = vmatmul.mubr.bf16.gmra.mrb[0].mxu0 %v252
      %v338 = vpop.f32.mrb[0].mxu0
      %v339 = vadd.f32 0.0, %v338
      %v340 = vpop.f32.mrb[0].mxu0
      %v341 = vpop.f32.mrb[0].mxu0
      %v342 = vadd.f32 0.0, %v341
      %v343 = vpop.f32.mrb[0].mxu0
      %344 = vmatprep.mubr.bf16.mxu0 0
      %345 = vmatmul.mubr.bf16.gmra.mrb[0].mxu0 %v253
      %v346 = vpop.f32.mrb[0].mxu0
      %v347 = vadd.f32 0.0, %v346
      %v348 = vpop.f32.mrb[0].mxu0
      %v349 = vpop.f32.mrb[0].mxu0
      %v350 = vadd.f32 0.0, %v349
      %v351 = vpop.f32.mrb[0].mxu0
      %352 = vdwg.mxu0
      %v353 = vld [vmem:[%s209] sm:$0xf]
      %v354 = vld [vmem:[%s209 + $0x4] sm:$0xf]
      %v355 = vld [vmem:[%s209 + $0x8] sm:$0xf]
      %v356 = vld [vmem:[%s209 + $0xc] sm:$0xf]
      %v357 = vunpack.c.l.bf16 %v353
      %v358 = vunpack.c.l.bf16 %v354
      %v359 = vunpack.c.l.bf16 %v355
      %v360 = vunpack.c.l.bf16 %v356
      %v361 = vld [vmem:[%s3] sm:$0x1]
      %v362 = vlaneseq
      %v363 = vshrl.u32 %v362, 7
      %v364 = vsub.s32 0, %v363
      %v365 = vrot.slane %v361, %v364
      %v366 = vmul.f32 %v357, %v365
      %v367 = vmul.f32 %v358, %v365
      %v368 = vmul.f32 %v359, %v365
      %v369 = vmul.f32 %v360, %v365
      %v370 = vld [vmem:[%s3 + $0x1] sm:$0x1]
      %v371 = vlaneseq
      %v372 = vshrl.u32 %v371, 7
      %v373 = vsub.s32 0, %v372
      %v374 = vrot.slane %v370, %v373
      %v375 = vadd.f32 %v366, %v374
      %v376 = vadd.f32 %v367, %v374
      %v377 = vadd.f32 %v368, %v374
      %v378 = vadd.f32 %v369, %v374
      %v379 = vld [vmem:[%s3 + $0x2] sm:$0x1]
      %v380 = vlaneseq
      %v381 = vshrl.u32 %v380, 7
      %v382 = vsub.s32 0, %v381
      %v383 = vrot.slane %v379, %v382
      %v384 = vmul.f32 %v339, %v383
      %v385 = vmul.f32 %v342, %v383
      %v386 = vmul.f32 %v347, %v383
      %v387 = vmul.f32 %v350, %v383
      %v388 = vadd.f32 %v375, %v384
      %v389 = vadd.f32 %v376, %v385
      %v390 = vadd.f32 %v377, %v386
      %v391 = vadd.f32 %v378, %v387
      %v392 = vld [vmem:[%s3 + $0x3] sm:$0x1]
      %v393 = vlaneseq
      %v394 = vshrl.u32 %v393, 7
      %v395 = vsub.s32 0, %v394
      %v396 = vrot.slane %v392, %v395
      %v397 = vadd.f32 %v388, %v396
      %v398 = vadd.f32 %v389, %v396
      %v399 = vadd.f32 %v390, %v396
      %v400 = vadd.f32 %v391, %v396
      %v401 = vmax.f32 %v397, 0.0
      %v402 = vmax.f32 %v398, 0.0
      %v403 = vmax.f32 %v399, 0.0
      %v404 = vmax.f32 %v400, 0.0
      %405 = vst [vmem:[%s221] sm:$0xff] %v401
      %406 = vst [vmem:[%s221 + $0x8] sm:$0xff] %v402
      %407 = vst [vmem:[%s221 + $0x10] sm:$0xff] %v403
      %408 = vst [vmem:[%s221 + $0x18] sm:$0xff] %v404
      %s409 = smul.u32 4, %s15
      %p410 = scmp.lt.s32.totalorder %s409, 7
      %s411 = scalar_select %p410, %s409, 7
      %s412 = smul.addr %s411, 8
      %s413 = scalar_lea.vmem %s4, %s412
      // Predicated region
      $region37: #{basic_block_forward.5} parent=35 // pred_check
        %p414 = pneg %p127
      $region38: #{basic_block_forward.5} parent=35 // pred_check_branch
        %416 = sbr.rel (%p414) target = $region40
      $region39: #{basic_block_forward.5} parent=35 // pred_region
        %s417 = smul.u32 4, %s15
      $region40: #{basic_block_forward.5} parent=35 // pred_fallthru
        _
    $region36: #{basic_block_forward.5} parent=5 // pred_fallthru
      _
    %p418 = scmp.le.s32.totalorder 2, %s10
    // Predicated region
    $region41: #{basic_block_forward.5} parent=5 // pred_check
      %p419 = pneg %p418
    $region42: #{basic_block_forward.5} parent=5 // pred_check_branch
      %421 = sbr.rel (%p419) target = $region44
    $region43: #{basic_block_forward.5} parent=5 // pred_region
      %s422 = ssub.s32 %s10, 2
      // Predicated region
      $region45: #{basic_block_forward.5} parent=43 // pred_check
        %p423 = pneg %p133
      $region46: #{basic_block_forward.5} parent=43 // pred_check_branch
        %425 = sbr.rel (%p423) target = $region48
      $region47: #{basic_block_forward.5} parent=43 // pred_region
        %s426 = smul.u32 4, %s16
        %p427 = scmp.lt.s32.totalorder %s426, 7
        %s428 = scalar_select %p427, %s426, 7
        %s429 = smul.addr %s428, 8
        %s430 = scalar_lea.vmem %s4, %s429
      $region48: #{basic_block_forward.5} parent=43 // pred_fallthru
        _
    $region44: #{basic_block_forward.5} parent=5 // pred_fallthru
      _
  $region6: #{basic_block_forward.5} parent=0 // loop_footer
    %s14 = sadd.s32 1, %s10
  $region7: #{basic_block_forward.5} parent=0 // loop_footer_branch
    %9 = sbr.rel target = $region3
  $region8: #{basic_block_forward.5} parent=0 // loop_exit
    _

// kernel: basic_block_forward.4
$region0: #{basic_block_forward.4}
  #allocation0 [shape = 'u32[]', space=smem, size = 0x4, offset = 0x4, fixed_abs, tag = 'smem constant byte address 0x4 - core index']
  #allocation1 [shape = 'u32[144,128]{1,0:T(1,128)}', space=vmem, size = 0x12000, scoped, tag = 'internal scratch']
  %s0 = inlined_call_operand.vmem [shape: bf16[64,128], index: 0, kind: input, shape index: {}]
  %s1 = inlined_call_operand.vmem [shape: f32[8,128], index: 1, kind: input, shape index: {}]
  %s2 = inlined_call_operand.vmem [shape: bf16[384,128], index: 2, kind: input, shape index: {}]
  %s3 = inlined_call_operand.vmem [shape: bf16[64,128], index: 3, kind: output, shape index: {0}]
  %s4 = inlined_call_operand.vmem [shape: f32[16,128], index: 4, kind: output, shape index: {1}]
  %5 = xla_tuple %s3, %s4
  %s6 = sld [smem:[#allocation0]]
  $region57: #{basic_block_forward.4} parent=0
    _
  %s8 = ssub.s32 1, %s6
  %s9 = scalar_select 0, %s8, %s6
  loop: start=0, step=1, limit=4
  $region2: #{basic_block_forward.4} parent=0 // loop_pre_header
    _
  $region3: #{basic_block_forward.4} parent=0 // loop_header
    %s11 = sphi 0, %s15
    %p12 = scmp.ge.s32.totalorder %s11, 4
    %s18 = sphi 0, %s30
    %s19 = sphi 0, %s26
    %s20 = sphi 0, %s18
    %s21 = sphi 0, %s19
    %s22 = sphi 0, %s20
    %s23 = sphi 0, %s21
    %s35 = sphi 0, %s37
    %s38 = sphi 0, %s35
    %s39 = sphi 0, %s38
    %s55 = sphi 0, %s39
    %s59 = sphi 0, %s59
    %s61 = sphi 0, %s59
    %s62 = sphi 0, %s61
    %s76 = sphi 0, %s62
    %s80 = sphi 0, %s80
    %s82 = sphi 0, %s80
    %s83 = sphi 0, %s82
    %s97 = sphi 0, %s83
    %s105 = sphi 0, %s107
    %s108 = sphi 0, %s105
    %s109 = sphi 0, %s108
    %s125 = sphi 0, %s109
    %s131 = sphi 0, %s133
    %s134 = sphi 0, %s131
    %s135 = sphi 0, %s134
    %s151 = sphi 0, %s135
  $region4: #{basic_block_forward.4} parent=0 // loop_header_branch
    %14 = sbr.rel (%p12) target = $region8
  $region5: #{basic_block_forward.4} parent=0 // loop_body
    %s16 = ssub.s32 %s11, 1
    %s17 = ssub.s32 %s11, 2
    %s24 = sadd.s32 1, %s19
    %p25 = scmp.ge.s32.totalorder %s24, 1
    %s26 = scalar_select %p25, 0, %s24
    %s27 = sadd.s32 1, %s18
    %s28 = scalar_select %p25, %s27, %s18
    %p29 = scmp.ge.s32.totalorder %s28, 2
    %s30 = scalar_select %p29, 0, %s28
    %s31 = sadd.s32 %s18, %s19
    %s32 = sadd.s32 %s30, %s26
    %s33 = ssub.s32 %s31, %s32
    %p34 = scmp.eq.s32.totalorder %s33, 0
    %s36 = sadd.s32 %s35, 1
    %s37 = scalar_select %p34, %s35, %s36
    %p40 = pneg %p34
    %p41 = scmp.eq.s32.totalorder %s11, 1
    %p42 = por %p40, %p41
    %p43 = scmp.ne.s32.totalorder %s35, %s38
    %p44 = scmp.eq.s32.totalorder %s11, 0
    %p45 = por %p43, %p44
    %p46 = scmp.ne.s32.totalorder %s35, %s38
    %p47 = scmp.eq.s32.totalorder %s16, 1
    %p48 = por %p46, %p47
    %p49 = scmp.ne.s32.totalorder %s38, %s39
    %p50 = scmp.eq.s32.totalorder %s16, 0
    %p51 = por %p49, %p50
    %p52 = scmp.ne.s32.totalorder %s38, %s39
    %p53 = scmp.eq.s32.totalorder %s17, 1
    %p54 = por %p52, %p53
    %p56 = scmp.ne.s32.totalorder %s39, %s55
    %p57 = scmp.eq.s32.totalorder %s17, 0
    %p58 = por %p56, %p57
    %s60 = sadd.s32 %s59, 1
    %p63 = scmp.eq.s32.totalorder %s11, 1
    %p64 = scmp.ne.s32.totalorder %s59, %s61
    %p65 = scmp.eq.s32.totalorder %s11, 0
    %p66 = por %p64, %p65
    %p67 = scmp.ne.s32.totalorder %s59, %s61
    %p68 = scmp.eq.s32.totalorder %s16, 1
    %p69 = por %p67, %p68
    %p70 = scmp.ne.s32.totalorder %s61, %s62
    %p71 = scmp.eq.s32.totalorder %s16, 0
    %p72 = por %p70, %p71
    %p73 = scmp.ne.s32.totalorder %s61, %s62
    %p74 = scmp.eq.s32.totalorder %s17, 1
    %p75 = por %p73, %p74
    %p77 = scmp.ne.s32.totalorder %s62, %s76
    %p78 = scmp.eq.s32.totalorder %s17, 0
    %p79 = por %p77, %p78
    %s81 = sadd.s32 %s80, 1
    %p84 = scmp.eq.s32.totalorder %s11, 1
    %p85 = scmp.ne.s32.totalorder %s80, %s82
    %p86 = scmp.eq.s32.totalorder %s11, 0
    %p87 = por %p85, %p86
    %p88 = scmp.ne.s32.totalorder %s80, %s82
    %p89 = scmp.eq.s32.totalorder %s16, 1
    %p90 = por %p88, %p89
    %p91 = scmp.ne.s32.totalorder %s82, %s83
    %p92 = scmp.eq.s32.totalorder %s16, 0
    %p93 = por %p91, %p92
    %p94 = scmp.ne.s32.totalorder %s82, %s83
    %p95 = scmp.eq.s32.totalorder %s17, 1
    %p96 = por %p94, %p95
    %p98 = scmp.ne.s32.totalorder %s83, %s97
    %p99 = scmp.eq.s32.totalorder %s17, 0
    %p100 = por %p98, %p99
    %s101 = sadd.s32 %s18, %s19
    %s102 = sadd.s32 %s30, %s26
    %s103 = ssub.s32 %s101, %s102
    %p104 = scmp.eq.s32.totalorder %s103, 0
    %s106 = sadd.s32 %s105, 1
    %s107 = scalar_select %p104, %s105, %s106
    %p110 = pneg %p104
    %p111 = scmp.eq.s32.totalorder %s11, 1
    %p112 = por %p110, %p111
    %p113 = scmp.ne.s32.totalorder %s105, %s108
    %p114 = scmp.eq.s32.totalorder %s11, 0
    %p115 = por %p113, %p114
    %p116 = scmp.ne.s32.totalorder %s105, %s108
    %p117 = scmp.eq.s32.totalorder %s16, 1
    %p118 = por %p116, %p117
    %p119 = scmp.ne.s32.totalorder %s108, %s109
    %p120 = scmp.eq.s32.totalorder %s16, 0
    %p121 = por %p119, %p120
    %p122 = scmp.ne.s32.totalorder %s108, %s109
    %p123 = scmp.eq.s32.totalorder %s17, 1
    %p124 = por %p122, %p123
    %p126 = scmp.ne.s32.totalorder %s109, %s125
    %p127 = scmp.eq.s32.totalorder %s17, 0
    %p128 = por %p126, %p127
    %s129 = ssub.s32 %s18, %s30
    %p130 = scmp.eq.s32.totalorder %s129, 0
    %s132 = sadd.s32 %s131, 1
    %s133 = scalar_select %p130, %s131, %s132
    %p136 = pneg %p130
    %p137 = scmp.eq.s32.totalorder %s11, 1
    %p138 = por %p136, %p137
    %p139 = scmp.ne.s32.totalorder %s131, %s134
    %p140 = scmp.eq.s32.totalorder %s11, 0
    %p141 = por %p139, %p140
    %p142 = scmp.ne.s32.totalorder %s131, %s134
    %p143 = scmp.eq.s32.totalorder %s16, 1
    %p144 = por %p142, %p143
    %p145 = scmp.ne.s32.totalorder %s134, %s135
    %p146 = scmp.eq.s32.totalorder %s16, 0
    %p147 = por %p145, %p146
    %p148 = scmp.ne.s32.totalorder %s134, %s135
    %p149 = scmp.eq.s32.totalorder %s17, 1
    %p150 = por %p148, %p149
    %p152 = scmp.ne.s32.totalorder %s135, %s151
    %p153 = scmp.eq.s32.totalorder %s17, 0
    %p154 = por %p152, %p153
    %p155 = scmp.le.s32.totalorder 1, %s11
    %p156 = scmp.lt.s32.totalorder %s11, 3
    %p157 = pnand %p155, %p156
    %p158 = pneg %p157
    // Predicated region
    $region9: #{basic_block_forward.4} parent=5 // pred_check
      _
    $region10: #{basic_block_forward.4} parent=5 // pred_check_branch
      %160 = sbr.rel (%p157) target = $region12
    $region11: #{basic_block_forward.4} parent=5 // pred_region
      %s161 = ssub.s32 %s11, 1
      // Predicated region
      $region13: #{basic_block_forward.4} parent=11 // pred_check
        %p162 = pneg %p72
      $region14: #{basic_block_forward.4} parent=11 // pred_check_branch
        %164 = sbr.rel (%p162) target = $region16
      $region15: #{basic_block_forward.4} parent=11 // pred_region
        _
      $region16: #{basic_block_forward.4} parent=11 // pred_fallthru
        _
      // Predicated region
      $region17: #{basic_block_forward.4} parent=11 // pred_check
        %p165 = pneg %p93
      $region18: #{basic_block_forward.4} parent=11 // pred_check_branch
        %167 = sbr.rel (%p165) target = $region20
      $region19: #{basic_block_forward.4} parent=11 // pred_region
        _
      $region20: #{basic_block_forward.4} parent=11 // pred_fallthru
        _
    $region12: #{basic_block_forward.4} parent=5 // pred_fallthru
      _
    %p168 = scmp.lt.s32.totalorder %s11, 2
    // Predicated region
    $region21: #{basic_block_forward.4} parent=5 // pred_check
      %p169 = pneg %p168
    $region22: #{basic_block_forward.4} parent=5 // pred_check_branch
      %171 = sbr.rel (%p169) target = $region24
    $region23: #{basic_block_forward.4} parent=5 // pred_region
      // Predicated region
      $region25: #{basic_block_forward.4} parent=23 // pred_check
        %p172 = pneg %p45
      $region26: #{basic_block_forward.4} parent=23 // pred_check_branch
        %174 = sbr.rel (%p172) target = $region28
      $region27: #{basic_block_forward.4} parent=23 // pred_region
        %s175 = sadd.s32 %s18, %s19
        %s176 = smul.u32 4, %s175
        %p177 = scmp.lt.s32.totalorder %s176, 7
        %s178 = scalar_select %p177, %s176, 7
        %s179 = smul.addr %s178, 4
        %s180 = scalar_lea.vmem %s0, %s179
        %s181 = sadd.s32 %s18, %s19
        %s182 = smul.u32 4, %s181
      $region28: #{basic_block_forward.4} parent=23 // pred_fallthru
        _
    $region24: #{basic_block_forward.4} parent=5 // pred_fallthru
      _
    %p183 = scmp.le.s32.totalorder 1, %s11
    %p184 = scmp.lt.s32.totalorder %s11, 3
    %p185 = pnand %p183, %p184
    %p186 = pneg %p185
    // Predicated region
    $region29: #{basic_block_forward.4} parent=5 // pred_check
      _
    $region30: #{basic_block_forward.4} parent=5 // pred_check_branch
      %188 = sbr.rel (%p185) target = $region32
    $region31: #{basic_block_forward.4} parent=5 // pred_region
      %s189 = ssub.s32 %s11, 1
      %s190 = sadd.s32 %s20, %s21
      %s191 = smul.u32 4, %s190
      %p192 = scmp.lt.s32.totalorder %s191, 7
      %s193 = scalar_select %p192, %s191, 7
      %s194 = smul.addr %s193, 4
      %s195 = scalar_lea.vmem %s0, %s194
      %p196 = pneg %p51
      %p197 = pneg %p48
      %p198 = pneg %p72
      %p199 = pneg %p69
      %p200 = pneg %p93
      %p201 = pneg %p90
      %p202 = pneg %p121
      %p203 = pneg %p118
      %s204 = sadd.s32 %s20, %s21
      %s205 = smul.u32 4, %s204
      %p206 = scmp.lt.s32.totalorder %s205, 7
      %s207 = scalar_select %p206, %s205, 7
      %s208 = smul.addr %s207, 4
      %s209 = scalar_lea.vmem %s3, %s208
      %p210 = pneg %p147
      %p211 = pneg %p144
      %p212 = scmp.lt.s32.totalorder %s20, 1
      %s213 = scalar_select %p212, %s20, 1
      %s214 = smul.addr %s213, 8
      %s215 = scalar_lea.vmem %s4, %s214
      %s216 = sadd.s32 %s20, %s21
      %s217 = smul.u32 4, %s216
      %p218 = scmp.lt.s32.totalorder %s217, 7
      %s219 = scalar_select %p218, %s217, 7
      %s220 = smul.addr %s219, 4
      %s221 = scalar_lea.vmem %s0, %s220
      %s222 = sadd.s32 %s20, %s21
      %s223 = smul.u32 4, %s222
      %s224 = sadd.s32 %s20, %s21
      %s225 = smul.u32 4, %s224
      %p226 = scmp.lt.s32.totalorder %s225, 7
      %s227 = scalar_select %p226, %s225, 7
      %s228 = smul.addr %s227, 4
      %s229 = scalar_lea.vmem %s3, %s228
      %s230 = sadd.s32 %s20, %s21
      %s231 = smul.u32 4, %s230
      %p232 = scmp.lt.s32.totalorder %s20, 1
      %s233 = scalar_select %p232, %s20, 1
      %s234 = smul.addr %s233, 8
      %s235 = scalar_lea.vmem %s4, %s234
      %p239 = scmp.eq.s32.totalorder %s21, 0
      // Predicated region
      $region33: #{basic_block_forward.4} parent=31 // pred_check
        %p240 = pneg %p239
      $region34: #{basic_block_forward.4} parent=31 // pred_check_branch
        %242 = sbr.rel (%p240) target = $region36
      $region35: #{basic_block_forward.4} parent=31 // pred_region
        %243 = vst [vmem:[%s235] sm:$0xff] 0.0
      $region36: #{basic_block_forward.4} parent=31 // pred_fallthru
        _
      %v244 = vld [vmem:[%s221] sm:$0xf]
      %v245 = vld [vmem:[%s221 + $0x4] sm:$0xf]
      %v246 = vld [vmem:[%s221 + $0x8] sm:$0xf]
      %v247 = vld [vmem:[%s221 + $0xc] sm:$0xf]
      %v248 = vunpack.c.l.bf16 %v244
      %v249 = vunpack.c.l.bf16 %v245
      %v250 = vunpack.c.l.bf16 %v246
      %v251 = vunpack.c.l.bf16 %v247
      %v252 = vld [vmem:[%s1] sm:$0x1]
      %v253 = vlaneseq
      %v254 = vshrl.u32 %v253, 7
      %v255 = vsub.s32 0, %v254
      %v256 = vrot.slane %v252, %v255
      %v257 = vmul.f32 %v248, %v256
      %v258 = vmul.f32 %v249, %v256
      %v259 = vmul.f32 %v250, %v256
      %v260 = vmul.f32 %v251, %v256
      %v261 = vld [vmem:[%s1 + $0x1] sm:$0x1]
      %v262 = vlaneseq
      %v263 = vshrl.u32 %v262, 7
      %v264 = vsub.s32 0, %v263
      %v265 = vrot.slane %v261, %v264
      %v266 = vadd.f32 %v257, %v265
      %v267 = vadd.f32 %v258, %v265
      %v268 = vadd.f32 %v259, %v265
      %v269 = vadd.f32 %v260, %v265
      %v270 = vmax.f32 %v266, 0.0
      %v271 = vmax.f32 %v267, 0.0
      %v272 = vmax.f32 %v268, 0.0
      %v273 = vmax.f32 %v269, 0.0
      %v274 = vpack.c.bf16 %v271, %v270
      %v275 = vpack.c.bf16 %v273, %v272
      %v276 = vlaneseq
      %v277 = vshrl.u32 %v276, 7
      %v278 = vadd.s32 %v277, 8
      %v279 = vadd.s32 %v277, 16
      %v280 = vadd.s32 %v277, 24
      %vm281 = vcmp.lt.s32.totalorder %v277, 0
      %v282 = vsub.s32 0, %v277
      %v283 = vsel %vm281, %v282, %v277
      %v284 = vshrl.u32 %v283, 4
      %v285 = vand.u32 %v283, 15
      %v286 = vsub.s32 0, %v285
      %v287 = vsel %vm281, %v286, %v285
      %vm288 = vcmp.lt.s32.totalorder %v278, 0
      %v289 = vsub.s32 0, %v278
      %v290 = vsel %vm288, %v289, %v278
      %v291 = vshrl.u32 %v290, 4
      %v292 = vand.u32 %v290, 15
      %v293 = vsub.s32 0, %v292
      %v294 = vsel %vm288, %v293, %v292
      %vm295 = vcmp.lt.s32.totalorder %v279, 0
      %v296 = vsub.s32 0, %v279
      %v297 = vsel %vm295, %v296, %v279
      %v298 = vshrl.u32 %v297, 4
      %v299 = vand.u32 %v297, 15
      %v300 = vsub.s32 0, %v299
      %v301 = vsel %vm295, %v300, %v299
      %vm302 = vcmp.lt.s32.totalorder %v280, 0
      %v303 = vsub.s32 0, %v280
      %v304 = vsel %vm302, %v303, %v280
      %v305 = vshrl.u32 %v304, 4
      %v306 = vand.u32 %v304, 15
      %v307 = vsub.s32 0, %v306
      %v308 = vsel %vm302, %v307, %v306
      %vm309 = vcmp.ne.s32.totalorder %v287, 0
      %vm310 = vcmp.ne.s32.totalorder %v294, 0
      %vm311 = vcmp.ne.s32.totalorder %v301, 0
      %vm312 = vcmp.ne.s32.totalorder %v308, 0
      %vm313 = vcmp.lt.s32.totalorder %v287, 0
      %vm314 = vcmp.lt.s32.totalorder %v294, 0
      %vm315 = vcmp.lt.s32.totalorder %v301, 0
      %vm316 = vcmp.lt.s32.totalorder %v308, 0
      %vm317 = vmand %vm313, %vm309
      %vm318 = vmand %vm314, %vm310
      %vm319 = vmand %vm315, %vm311
      %vm320 = vmand %vm316, %vm312
      %v321 = vadd.s32 %v287, 16
      %v322 = vadd.s32 %v294, 16
      %v323 = vadd.s32 %v301, 16
      %v324 = vadd.s32 %v308, 16
      %v325 = vsel %vm317, %v321, %v287
      %v326 = vsel %vm318, %v322, %v294
      %v327 = vsel %vm319, %v323, %v301
      %v328 = vsel %vm320, %v324, %v308
      %vm329 = vcmp.eq.s32.totalorder %v325, 0
      %vm330 = vcmp.eq.s32.totalorder %v326, 0
      %vm331 = vcmp.eq.s32.totalorder %v327, 0
      %vm332 = vcmp.eq.s32.totalorder %v328, 0
      %vm333 = vsmask.f32 256
      %v335 = vshrl.u32 %v274, 16
      %v337 = vrot.slane %v335, 7
      %v338 = vshll.u32 %v274, 16
      %v340 = vor.u32 %v337, %v338
      %v342 = vshrl.u32 %v275, 16
      %v344 = vrot.slane %v342, 7
      %v345 = vshll.u32 %v275, 16
      %v347 = vor.u32 %v344, %v345
      %v348 = vsel %vm333, %v337, %v347
      %vm351 = vcmask 1040384
      %vm352 = vmand %vm351, %vm333
      %v353 = vsel %vm352, 0, %v340
      %v354 = vsel %vm329, 1, 0
      %v355 = vsel %vm330, 1, 0
      %v356 = vsel %vm331, 1, 0
      %v357 = vsel %vm332, 1, 0
      %vm358 = vcmp.eq.s32.totalorder %v354, 1
      %vm359 = vcmp.eq.s32.totalorder %v355, 1
      %vm360 = vcmp.eq.s32.totalorder %v356, 1
      %vm361 = vcmp.eq.s32.totalorder %v357, 1
      %vm362 = vmpackc.low %vm358, %vm358
      %vm363 = vmpackc.low %vm359, %vm359
      %vm364 = vmpackc.low %vm360, %vm360
      %vm365 = vmpackc.low %vm361, %vm361
      %v366 = vsel %vm362, 65537, 0
      %v367 = vsel %vm363, 65537, 0
      %v368 = vsel %vm364, 65537, 0
      %v369 = vsel %vm365, 65537, 0
      %v370 = vunpack.c.l.b16 %v366
      %v371 = vunpack.c.l.b16 %v367
      %v372 = vunpack.c.l.b16 %v368
      %v373 = vunpack.c.l.b16 %v369
      %v374 = vpack.c.b16 %v371, %v370
      %v375 = vpack.c.b16 %v373, %v372
      %vm376 = vcmp.ne.s16.totalorder %v374, 0
      %vm377 = vcmp.ne.s16.totalorder %v375, 0
      %v378 = vsel %vm376, 0, %v353
      %v379 = vsel %vm377, 0, %v348
      %vm380 = vcmp.eq.s32.totalorder %v325, 15
      %vm381 = vcmp.eq.s32.totalorder %v326, 15
      %vm382 = vcmp.eq.s32.totalorder %v327, 15
      %vm383 = vcmp.eq.s32.totalorder %v328, 15
      %vm384 = vsmask.f32 7424
      %v385 = vrot.slane %v338, 1
      %v386 = vor.u32 %v335, %v385
      %v387 = vrot.slane %v345, 1
      %v388 = vsel %vm384, %v386, %v387
      %v389 = vor.u32 %v342, %v387
      %vm392 = vcmask 1047552
      %vm393 = vmand %vm392, %vm384
      %v394 = vsel %vm393, %v389, 0
      %v395 = vsel %vm380, 1, 0
      %v396 = vsel %vm381, 1, 0
      %v397 = vsel %vm382, 1, 0
      %v398 = vsel %vm383, 1, 0
      %vm399 = vcmp.eq.s32.totalorder %v395, 1
      %vm400 = vcmp.eq.s32.totalorder %v396, 1
      %vm401 = vcmp.eq.s32.totalorder %v397, 1
      %vm402 = vcmp.eq.s32.totalorder %v398, 1
      %vm403 = vmpackc.low %vm399, %vm399
      %vm404 = vmpackc.low %vm400, %vm400
      %vm405 = vmpackc.low %vm401, %vm401
      %vm406 = vmpackc.low %vm402, %vm402
      %v407 = vsel %vm403, 65537, 0
      %v408 = vsel %vm404, 65537, 0
      %v409 = vsel %vm405, 65537, 0
      %v410 = vsel %vm406, 65537, 0
      %v411 = vunpack.c.l.b16 %v407
      %v412 = vunpack.c.l.b16 %v408
      %v413 = vunpack.c.l.b16 %v409
      %v414 = vunpack.c.l.b16 %v410
      %v415 = vpack.c.b16 %v412, %v411
      %v416 = vpack.c.b16 %v414, %v413
      %vm417 = vcmp.ne.s16.totalorder %v415, 0
      %vm418 = vcmp.ne.s16.totalorder %v416, 0
      %v419 = vsel %vm417, 0, %v388
      %v420 = vsel %vm418, 0, %v394
      %v421 = vld [vmem:[%s2] sm:$0xf]
      %v422 = vld [vmem:[%s2 + $0x4] sm:$0xf]
      %v423 = vld [vmem:[%s2 + $0x8] sm:$0xf]
      %v424 = vld [vmem:[%s2 + $0xc] sm:$0xf]
      %v425 = vld [vmem:[%s2 + $0x10] sm:$0xf]
      %v426 = vld [vmem:[%s2 + $0x14] sm:$0xf]
      %v427 = vld [vmem:[%s2 + $0x18] sm:$0xf]
      %v428 = vld [vmem:[%s2 + $0x1c] sm:$0xf]
      %v429 = vld [vmem:[%s2 + $0x20] sm:$0xf]
      %v430 = vld [vmem:[%s2 + $0x24] sm:$0xf]
      %v431 = vld [vmem:[%s2 + $0x28] sm:$0xf]
      %v432 = vld [vmem:[%s2 + $0x2c] sm:$0xf]
      %v433 = vld [vmem:[%s2 + $0x30] sm:$0xf]
      %v434 = vld [vmem:[%s2 + $0x34] sm:$0xf]
      %v435 = vld [vmem:[%s2 + $0x38] sm:$0xf]
      %v436 = vld [vmem:[%s2 + $0x3c] sm:$0xf]
      %v437 = vld [vmem:[%s2 + $0x40] sm:$0xf]
      %v438 = vld [vmem:[%s2 + $0x44] sm:$0xf]
      %v439 = vld [vmem:[%s2 + $0x48] sm:$0xf]
      %v440 = vld [vmem:[%s2 + $0x4c] sm:$0xf]
      %v441 = vld [vmem:[%s2 + $0x50] sm:$0xf]
      %v442 = vld [vmem:[%s2 + $0x54] sm:$0xf]
      %v443 = vld [vmem:[%s2 + $0x58] sm:$0xf]
      %v444 = vld [vmem:[%s2 + $0x5c] sm:$0xf]
      %v445 = vld [vmem:[%s2 + $0x60] sm:$0xf]
      %v446 = vld [vmem:[%s2 + $0x64] sm:$0xf]
      %v447 = vld [vmem:[%s2 + $0x68] sm:$0xf]
      %v448 = vld [vmem:[%s2 + $0x6c] sm:$0xf]
      %v449 = vld [vmem:[%s2 + $0x70] sm:$0xf]
      %v450 = vld [vmem:[%s2 + $0x74] sm:$0xf]
      %v451 = vld [vmem:[%s2 + $0x78] sm:$0xf]
      %v452 = vld [vmem:[%s2 + $0x7c] sm:$0xf]
      %v453 = vld [vmem:[%s2 + $0x80] sm:$0xf]
      %v454 = vld [vmem:[%s2 + $0x84] sm:$0xf]
      %v455 = vld [vmem:[%s2 + $0x88] sm:$0xf]
      %v456 = vld [vmem:[%s2 + $0x8c] sm:$0xf]
      %v457 = vld [vmem:[%s2 + $0x90] sm:$0xf]
      %v458 = vld [vmem:[%s2 + $0x94] sm:$0xf]
      %v459 = vld [vmem:[%s2 + $0x98] sm:$0xf]
      %v460 = vld [vmem:[%s2 + $0x9c] sm:$0xf]
      %v461 = vld [vmem:[%s2 + $0xa0] sm:$0xf]
      %v462 = vld [vmem:[%s2 + $0xa4] sm:$0xf]
      %v463 = vld [vmem:[%s2 + $0xa8] sm:$0xf]
      %v464 = vld [vmem:[%s2 + $0xac] sm:$0xf]
      %v465 = vld [vmem:[%s2 + $0xb0] sm:$0xf]
      %v466 = vld [vmem:[%s2 + $0xb4] sm:$0xf]
      %v467 = vld [vmem:[%s2 + $0xb8] sm:$0xf]
      %v468 = vld [vmem:[%s2 + $0xbc] sm:$0xf]
      %v517 = vunpack.c.l.b16 %v421
      %v518 = vunpack.c.l.b16 %v422
      %v519 = vunpack.c.l.b16 %v423
      %v520 = vunpack.c.l.b16 %v424
      %v521 = vunpack.c.l.b16 %v425
      %v522 = vunpack.c.l.b16 %v426
      %v523 = vunpack.c.l.b16 %v427
      %v524 = vunpack.c.l.b16 %v428
      %v525 = vunpack.c.l.b16 %v429
      %v526 = vunpack.c.l.b16 %v430
      %v527 = vunpack.c.l.b16 %v431
      %v528 = vunpack.c.l.b16 %v432
      %v529 = vunpack.c.l.b16 %v433
      %v530 = vunpack.c.l.b16 %v434
      %v531 = vunpack.c.l.b16 %v435
      %v532 = vunpack.c.l.b16 %v436
      %v533 = vunpack.c.l.b16 %v437
      %v534 = vunpack.c.l.b16 %v438
      %v535 = vunpack.c.l.b16 %v439
      %v536 = vunpack.c.l.b16 %v440
      %v537 = vunpack.c.l.b16 %v441
      %v538 = vunpack.c.l.b16 %v442
      %v539 = vunpack.c.l.b16 %v443
      %v540 = vunpack.c.l.b16 %v444
      %v541 = vunpack.c.l.b16 %v445
      %v542 = vunpack.c.l.b16 %v446
      %v543 = vunpack.c.l.b16 %v447
      %v544 = vunpack.c.l.b16 %v448
      %v545 = vunpack.c.l.b16 %v449
      %v546 = vunpack.c.l.b16 %v450
      %v547 = vunpack.c.l.b16 %v451
      %v548 = vunpack.c.l.b16 %v452
      %v549 = vunpack.c.l.b16 %v453
      %v550 = vunpack.c.l.b16 %v454
      %v551 = vunpack.c.l.b16 %v455
      %v552 = vunpack.c.l.b16 %v456
      %v553 = vunpack.c.l.b16 %v457
      %v554 = vunpack.c.l.b16 %v458
      %v555 = vunpack.c.l.b16 %v459
      %v556 = vunpack.c.l.b16 %v460
      %v557 = vunpack.c.l.b16 %v461
      %v558 = vunpack.c.l.b16 %v462
      %v559 = vunpack.c.l.b16 %v463
      %v560 = vunpack.c.l.b16 %v464
      %v561 = vunpack.c.l.b16 %v465
      %v562 = vunpack.c.l.b16 %v466
      %v563 = vunpack.c.l.b16 %v467
      %v564 = vunpack.c.l.b16 %v468
      %v565 = vpack.c.b16 %v518, %v517
      %v566 = vpack.c.b16 %v520, %v519
      %v567 = vpack.c.b16 %v522, %v521
      %v568 = vpack.c.b16 %v524, %v523
      %v569 = vpack.c.b16 %v526, %v525
      %v570 = vpack.c.b16 %v528, %v527
      %v571 = vpack.c.b16 %v530, %v529
      %v572 = vpack.c.b16 %v532, %v531
      %v573 = vpack.c.b16 %v534, %v533
      %v574 = vpack.c.b16 %v536, %v535
      %v575 = vpack.c.b16 %v538, %v537
      %v576 = vpack.c.b16 %v540, %v539
      %v577 = vpack.c.b16 %v542, %v541
      %v578 = vpack.c.b16 %v544, %v543
      %v579 = vpack.c.b16 %v546, %v545
      %v580 = vpack.c.b16 %v548, %v547
      %v581 = vpack.c.b16 %v550, %v549
      %v582 = vpack.c.b16 %v552, %v551
      %v583 = vpack.c.b16 %v554, %v553
      %v584 = vpack.c.b16 %v556, %v555
      %v585 = vpack.c.b16 %v558, %v557
      %v586 = vpack.c.b16 %v560, %v559
      %v587 = vpack.c.b16 %v562, %v561
      %v588 = vpack.c.b16 %v564, %v563
      %613 = vmatprep.subr.bf16.mxu0 0
      %614 = vmatpush1.bf16.msra.mxu0 %v565
      %615 = vmatprep.subr.bf16.mxu0 0
      %616 = vmatpush1.bf16.msra.mxu0 %v566
      %617 = vmatprep.subr.bf16.mxu0 0
      %618 = vmatpush1.bf16.msra.mxu0 %v567
      %619 = vmatprep.subr.bf16.mxu0 0
      %620 = vmatpush1.bf16.msra.mxu0 %v568
      %621 = vmatprep.subr.bf16.mxu0 0
      %622 = vmatpush1.bf16.msra.mxu0 %v569
      %623 = vmatprep.subr.bf16.mxu0 0
      %624 = vmatpush1.bf16.msra.mxu0 %v570
      %625 = vmatprep.subr.bf16.mxu0 0
      %626 = vmatpush1.bf16.msra.mxu0 %v571
      %627 = vmatprep.subr.bf16.mxu0 0
      %628 = vmatpush1.bf16.msra.mxu0 %v572
      %629 = vmatprep.subr.bf16.mxu0 0
      %630 = vmatpush1.bf16.msra.mxu0 %v573
      %631 = vmatprep.subr.bf16.mxu0 0
      %632 = vmatpush1.bf16.msra.mxu0 %v574
      %633 = vmatprep.subr.bf16.mxu0 0
      %634 = vmatpush1.bf16.msra.mxu0 %v575
      %635 = vmatprep.subr.bf16.mxu0 0
      %636 = vmatpush1.bf16.msra.mxu0 %v576
      %637 = vmatprep.subr.bf16.mxu0 0
      %638 = vmatpush1.bf16.msra.mxu0 %v577
      %639 = vmatprep.subr.bf16.mxu0 0
      %640 = vmatpush1.bf16.msra.mxu0 %v578
      %641 = vmatprep.subr.bf16.mxu0 0
      %642 = vmatpush1.bf16.msra.mxu0 %v579
      %643 = vmatprep.subr.bf16.mxu0 0
      %644 = vmatpush1.bf16.msra.mxu0 %v580
      %645 = vmatprep.mubr.bf16.mxu0 %v274
      %646 = vmatmul.mubr.bf16.gmra.mrb[0].mxu0 %v378
      %v647 = vpop.f32.mrb[0].mxu0
      %v648 = vadd.f32 0.0, %v647
      %v649 = vpop.f32.mrb[0].mxu0
      %v650 = vpop.f32.mrb[0].mxu0
      %v651 = vadd.f32 0.0, %v650
      %v652 = vpop.f32.mrb[0].mxu0
      %653 = vmatprep.mubr.bf16.mxu0 %v275
      %654 = vmatmul.mubr.bf16.gmra.mrb[0].mxu0 %v379
      %v655 = vpop.f32.mrb[0].mxu0
      %v656 = vadd.f32 0.0, %v655
      %v657 = vpop.f32.mrb[0].mxu0
      %v658 = vpop.f32.mrb[0].mxu0
      %v659 = vadd.f32 0.0, %v658
      %v660 = vpop.f32.mrb[0].mxu0
      %661 = vdwg.mxu0
      %662 = vmatprep.subr.bf16.mxu0 0
      %663 = vmatpush1.bf16.msra.mxu0 %v581
      %664 = vmatprep.subr.bf16.mxu0 0
      %665 = vmatpush1.bf16.msra.mxu0 %v582
      %666 = vmatprep.subr.bf16.mxu0 0
      %667 = vmatpush1.bf16.msra.mxu0 %v583
      %668 = vmatprep.subr.bf16.mxu0 0
      %669 = vmatpush1.bf16.msra.mxu0 %v584
      %670 = vmatprep.subr.bf16.mxu0 0
      %671 = vmatpush1.bf16.msra.mxu0 %v585
      %672 = vmatprep.subr.bf16.mxu0 0
      %673 = vmatpush1.bf16.msra.mxu0 %v586
      %674 = vmatprep.subr.bf16.mxu0 0
      %675 = vmatpush1.bf16.msra.mxu0 %v587
      %676 = vmatprep.subr.bf16.mxu0 0
      %677 = vmatpush1.bf16.msra.mxu0 %v588
      %678 = vmatprep.subr.bf16.mxu0 0
      %679 = vmatpush1.bf16.msra.mxu0 0
      %680 = vmatprep.subr.bf16.mxu0 0
      %681 = vmatpush1.bf16.msra.mxu0 0
      %682 = vmatprep.subr.bf16.mxu0 0
      %683 = vmatpush1.bf16.msra.mxu0 0
      %684 = vmatprep.subr.bf16.mxu0 0
      %685 = vmatpush1.bf16.msra.mxu0 0
      %686 = vmatprep.subr.bf16.mxu0 0
      %687 = vmatpush1.bf16.msra.mxu0 0
      %688 = vmatprep.subr.bf16.mxu0 0
      %689 = vmatpush1.bf16.msra.mxu0 0
      %690 = vmatprep.subr.bf16.mxu0 0
      %691 = vmatpush1.bf16.msra.mxu0 0
      %692 = vmatprep.subr.bf16.mxu0 0
      %693 = vmatpush1.bf16.msra.mxu0 0
      %694 = vmatprep.mubr.bf16.mxu0 0
      %695 = vmatmul.mubr.bf16.gmra.mrb[0].mxu0 %v419
      %v696 = vpop.f32.mrb[0].mxu0
      %v697 = vadd.f32 %v648, %v696
      %v698 = vpop.f32.mrb[0].mxu0
      %v699 = vpop.f32.mrb[0].mxu0
      %v700 = vadd.f32 %v651, %v699
      %v701 = vpop.f32.mrb[0].mxu0
      %702 = vmatprep.mubr.bf16.mxu0 0
      %703 = vmatmul.mubr.bf16.gmra.mrb[0].mxu0 %v420
      %v704 = vpop.f32.mrb[0].mxu0
      %v705 = vadd.f32 %v656, %v704
      %v706 = vpop.f32.mrb[0].mxu0
      %v707 = vpop.f32.mrb[0].mxu0
      %v708 = vadd.f32 %v659, %v707
      %v709 = vpop.f32.mrb[0].mxu0
      %710 = vdwg.mxu0
      %v711 = vpack.c.bf16 %v700, %v697
      %v712 = vpack.c.bf16 %v708, %v705
      %v715 = vunpack.c.l.b16 %v711
      %v716 = vunpack.c.h.b16 %v711
      %v717 = vunpack.c.l.b16 %v712
      %v718 = vunpack.c.h.b16 %v712
      %v719 = vpack.c.b16 %v715, %v715
      %v720 = vpack.c.b16 %v716, %v716
      %v721 = vpack.c.b16 %v717, %v717
      %v722 = vpack.c.b16 %v718, %v718
      %727 = vst [vmem:[%s229] sm:$0xf] %v719
      %728 = vst [vmem:[%s229 + $0x4] sm:$0xf] %v720
      %729 = vst [vmem:[%s229 + $0x8] sm:$0xf] %v721
      %730 = vst [vmem:[%s229 + $0xc] sm:$0xf] %v722
      %s731 = sadd.s32 %s20, %s21
      %s732 = smul.u32 %s731, 32
      %v733 = vstv %s732
      %v734 = vadd.s32 %v733, %v277
      %v735 = vadd.s32 %v733, %v278
      %v736 = vadd.s32 %v733, %v279
      %v737 = vadd.s32 %v733, %v280
      %vm738 = vcmp.lt.s32.totalorder %v734, 64
      %vm739 = vcmp.lt.s32.totalorder %v735, 64
      %vm740 = vcmp.lt.s32.totalorder %v736, 64
      %vm741 = vcmp.lt.s32.totalorder %v737, 64
      %v742 = vsel %vm738, 1, 0
      %v743 = vsel %vm739, 1, 0
      %v744 = vsel %vm740, 1, 0
      %v745 = vsel %vm741, 1, 0
      %vm746 = vcmp.eq.s32.totalorder %v742, 1
      %vm747 = vcmp.eq.s32.totalorder %v743, 1
      %vm748 = vcmp.eq.s32.totalorder %v744, 1
      %vm749 = vcmp.eq.s32.totalorder %v745, 1
      %v750 = vsel %vm746, %v697, 0.0
      %v751 = vsel %vm747, %v700, 0.0
      %v752 = vsel %vm748, %v705, 0.0
      %v753 = vsel %vm749, %v708, 0.0
      %v754 = vld [vmem:[%s235] sm:$0x3]
      %v755 = vadd.f32 %v750, %v751
      %v756 = vadd.f32 %v755, %v752
      %v757 = vadd.f32 %v756, %v753
      %v758 = vrot.slane %v757, 4
      %v759 = vadd.f32 %v757, %v758
      %v760 = vrot.slane %v759, 2
      %v761 = vadd.f32 %v759, %v760
      %v762 = vrot.slane %v761, 1
      %v763 = vadd.f32 %v761, %v762
      %v764 = vmul.f32 %v750, %v750
      %v765 = vmul.f32 %v751, %v751
      %v766 = vmul.f32 %v752, %v752
      %v767 = vmul.f32 %v753, %v753
      %v768 = vadd.f32 %v764, %v765
      %v769 = vadd.f32 %v768, %v766
      %v770 = vadd.f32 %v769, %v767
      %v771 = vrot.slane %v770, 4
      %v772 = vadd.f32 %v770, %v771
      %v773 = vrot.slane %v772, 2
      %v774 = vadd.f32 %v772, %v773
      %v775 = vrot.slane %v774, 1
      %v776 = vadd.f32 %v774, %v775
      %vm777 = vcmask 1040384
      %v778 = vsel %vm777, %v763, %v776
      %v779 = vadd.f32 %v754, %v778
      %780 = vst [vmem:[%s235] sm:$0x3] %v779
      %s781 = sadd.s32 %s20, %s21
      %s782 = smul.u32 4, %s781
      %p783 = scmp.lt.s32.totalorder %s782, 7
      %s784 = scalar_select %p783, %s782, 7
      %s785 = smul.addr %s784, 4
      %s786 = scalar_lea.vmem %s3, %s785
      %p787 = scmp.lt.s32.totalorder %s20, 1
      %s788 = scalar_select %p787, %s20, 1
      %s789 = smul.addr %s788, 8
      %s790 = scalar_lea.vmem %s4, %s789
      // Predicated region
      $region37: #{basic_block_forward.4} parent=31 // pred_check
        %p791 = pneg %p118
      $region38: #{basic_block_forward.4} parent=31 // pred_check_branch
        %793 = sbr.rel (%p791) target = $region40
      $region39: #{basic_block_forward.4} parent=31 // pred_region
        %s794 = sadd.s32 %s20, %s21
        %s795 = smul.u32 4, %s794
      $region40: #{basic_block_forward.4} parent=31 // pred_fallthru
        _
      // Predicated region
      $region41: #{basic_block_forward.4} parent=31 // pred_check
        %p796 = pneg %p144
      $region42: #{basic_block_forward.4} parent=31 // pred_check_branch
        %798 = sbr.rel (%p796) target = $region44
      $region43: #{basic_block_forward.4} parent=31 // pred_region
        _
      $region44: #{basic_block_forward.4} parent=31 // pred_fallthru
        _
    $region32: #{basic_block_forward.4} parent=5 // pred_fallthru
      _
    %p799 = scmp.le.s32.totalorder 2, %s11
    // Predicated region
    $region45: #{basic_block_forward.4} parent=5 // pred_check
      %p800 = pneg %p799
    $region46: #{basic_block_forward.4} parent=5 // pred_check_branch
      %802 = sbr.rel (%p800) target = $region48
    $region47: #{basic_block_forward.4} parent=5 // pred_region
      %s803 = ssub.s32 %s11, 2
      // Predicated region
      $region49: #{basic_block_forward.4} parent=47 // pred_check
        %p804 = pneg %p124
      $region50: #{basic_block_forward.4} parent=47 // pred_check_branch
        %806 = sbr.rel (%p804) target = $region52
      $region51: #{basic_block_forward.4} parent=47 // pred_region
        %s807 = sadd.s32 %s22, %s23
        %s808 = smul.u32 4, %s807
        %p809 = scmp.lt.s32.totalorder %s808, 7
        %s810 = scalar_select %p809, %s808, 7
        %s811 = smul.addr %s810, 4
        %s812 = scalar_lea.vmem %s3, %s811
      $region52: #{basic_block_forward.4} parent=47 // pred_fallthru
        _
      // Predicated region
      $region53: #{basic_block_forward.4} parent=47 // pred_check
        %p813 = pneg %p150
      $region54: #{basic_block_forward.4} parent=47 // pred_check_branch
        %815 = sbr.rel (%p813) target = $region56
      $region55: #{basic_block_forward.4} parent=47 // pred_region
        %p816 = scmp.lt.s32.totalorder %s22, 1
        %s817 = scalar_select %p816, %s22, 1
        %s818 = smul.addr %s817, 8
        %s819 = scalar_lea.vmem %s4, %s818
      $region56: #{basic_block_forward.4} parent=47 // pred_fallthru
        _
    $region48: #{basic_block_forward.4} parent=5 // pred_fallthru
      _
  $region6: #{basic_block_forward.4} parent=0 // loop_footer
    %s15 = sadd.s32 1, %s11
  $region7: #{basic_block_forward.4} parent=0 // loop_footer_branch
    %10 = sbr.rel target = $region3
  $region8: #{basic_block_forward.4} parent=0 // loop_exit
    _

// kernel: basic_block_forward.3
$region0: #{basic_block_forward.3}
  #allocation0 [shape = 'u32[]', space=smem, size = 0x4, offset = 0x4, fixed_abs, tag = 'smem constant byte address 0x4 - core index']
  #allocation1 [shape = 'u32[144,128]{1,0:T(1,128)}', space=vmem, size = 0x12000, scoped, tag = 'internal scratch']
  %s0 = inlined_call_operand.vmem [shape: bf16[64,128], index: 0, kind: input, shape index: {}]
  %s1 = inlined_call_operand.vmem [shape: bf16[384,128], index: 1, kind: input, shape index: {}]
  %s2 = inlined_call_operand.vmem [shape: bf16[128,128], index: 2, kind: input, shape index: {}]
  %s3 = inlined_call_operand.vmem [shape: bf16[64,128], index: 3, kind: output, shape index: {0}]
  %s4 = inlined_call_operand.vmem [shape: f32[16,128], index: 4, kind: output, shape index: {1}]
  %5 = xla_tuple %s3, %s4
  %s6 = sld [smem:[#allocation0]]
  $region57: #{basic_block_forward.3} parent=0
    _
  %s8 = ssub.s32 1, %s6
  %s9 = scalar_select 0, %s8, %s6
  loop: start=0, step=1, limit=4
  $region2: #{basic_block_forward.3} parent=0 // loop_pre_header
    _
  $region3: #{basic_block_forward.3} parent=0 // loop_header
    %s11 = sphi 0, %s15
    %p12 = scmp.ge.s32.totalorder %s11, 4
    %s18 = sphi 0, %s30
    %s19 = sphi 0, %s26
    %s20 = sphi 0, %s18
    %s21 = sphi 0, %s19
    %s22 = sphi 0, %s20
    %s23 = sphi 0, %s21
    %s35 = sphi 0, %s37
    %s38 = sphi 0, %s35
    %s39 = sphi 0, %s38
    %s55 = sphi 0, %s39
    %s59 = sphi 0, %s59
    %s61 = sphi 0, %s59
    %s62 = sphi 0, %s61
    %s76 = sphi 0, %s62
    %s80 = sphi 0, %s80
    %s82 = sphi 0, %s80
    %s83 = sphi 0, %s82
    %s97 = sphi 0, %s83
    %s105 = sphi 0, %s107
    %s108 = sphi 0, %s105
    %s109 = sphi 0, %s108
    %s125 = sphi 0, %s109
    %s131 = sphi 0, %s133
    %s134 = sphi 0, %s131
    %s135 = sphi 0, %s134
    %s151 = sphi 0, %s135
  $region4: #{basic_block_forward.3} parent=0 // loop_header_branch
    %14 = sbr.rel (%p12) target = $region8
  $region5: #{basic_block_forward.3} parent=0 // loop_body
    %s16 = ssub.s32 %s11, 1
    %s17 = ssub.s32 %s11, 2
    %s24 = sadd.s32 1, %s19
    %p25 = scmp.ge.s32.totalorder %s24, 1
    %s26 = scalar_select %p25, 0, %s24
    %s27 = sadd.s32 1, %s18
    %s28 = scalar_select %p25, %s27, %s18
    %p29 = scmp.ge.s32.totalorder %s28, 2
    %s30 = scalar_select %p29, 0, %s28
    %s31 = sadd.s32 %s18, %s19
    %s32 = sadd.s32 %s30, %s26
    %s33 = ssub.s32 %s31, %s32
    %p34 = scmp.eq.s32.totalorder %s33, 0
    %s36 = sadd.s32 %s35, 1
    %s37 = scalar_select %p34, %s35, %s36
    %p40 = pneg %p34
    %p41 = scmp.eq.s32.totalorder %s11, 1
    %p42 = por %p40, %p41
    %p43 = scmp.ne.s32.totalorder %s35, %s38
    %p44 = scmp.eq.s32.totalorder %s11, 0
    %p45 = por %p43, %p44
    %p46 = scmp.ne.s32.totalorder %s35, %s38
    %p47 = scmp.eq.s32.totalorder %s16, 1
    %p48 = por %p46, %p47
    %p49 = scmp.ne.s32.totalorder %s38, %s39
    %p50 = scmp.eq.s32.totalorder %s16, 0
    %p51 = por %p49, %p50
    %p52 = scmp.ne.s32.totalorder %s38, %s39
    %p53 = scmp.eq.s32.totalorder %s17, 1
    %p54 = por %p52, %p53
    %p56 = scmp.ne.s32.totalorder %s39, %s55
    %p57 = scmp.eq.s32.totalorder %s17, 0
    %p58 = por %p56, %p57
    %s60 = sadd.s32 %s59, 1
    %p63 = scmp.eq.s32.totalorder %s11, 1
    %p64 = scmp.ne.s32.totalorder %s59, %s61
    %p65 = scmp.eq.s32.totalorder %s11, 0
    %p66 = por %p64, %p65
    %p67 = scmp.ne.s32.totalorder %s59, %s61
    %p68 = scmp.eq.s32.totalorder %s16, 1
    %p69 = por %p67, %p68
    %p70 = scmp.ne.s32.totalorder %s61, %s62
    %p71 = scmp.eq.s32.totalorder %s16, 0
    %p72 = por %p70, %p71
    %p73 = scmp.ne.s32.totalorder %s61, %s62
    %p74 = scmp.eq.s32.totalorder %s17, 1
    %p75 = por %p73, %p74
    %p77 = scmp.ne.s32.totalorder %s62, %s76
    %p78 = scmp.eq.s32.totalorder %s17, 0
    %p79 = por %p77, %p78
    %s81 = sadd.s32 %s80, 1
    %p84 = scmp.eq.s32.totalorder %s11, 1
    %p85 = scmp.ne.s32.totalorder %s80, %s82
    %p86 = scmp.eq.s32.totalorder %s11, 0
    %p87 = por %p85, %p86
    %p88 = scmp.ne.s32.totalorder %s80, %s82
    %p89 = scmp.eq.s32.totalorder %s16, 1
    %p90 = por %p88, %p89
    %p91 = scmp.ne.s32.totalorder %s82, %s83
    %p92 = scmp.eq.s32.totalorder %s16, 0
    %p93 = por %p91, %p92
    %p94 = scmp.ne.s32.totalorder %s82, %s83
    %p95 = scmp.eq.s32.totalorder %s17, 1
    %p96 = por %p94, %p95
    %p98 = scmp.ne.s32.totalorder %s83, %s97
    %p99 = scmp.eq.s32.totalorder %s17, 0
    %p100 = por %p98, %p99
    %s101 = sadd.s32 %s18, %s19
    %s102 = sadd.s32 %s30, %s26
    %s103 = ssub.s32 %s101, %s102
    %p104 = scmp.eq.s32.totalorder %s103, 0
    %s106 = sadd.s32 %s105, 1
    %s107 = scalar_select %p104, %s105, %s106
    %p110 = pneg %p104
    %p111 = scmp.eq.s32.totalorder %s11, 1
    %p112 = por %p110, %p111
    %p113 = scmp.ne.s32.totalorder %s105, %s108
    %p114 = scmp.eq.s32.totalorder %s11, 0
    %p115 = por %p113, %p114
    %p116 = scmp.ne.s32.totalorder %s105, %s108
    %p117 = scmp.eq.s32.totalorder %s16, 1
    %p118 = por %p116, %p117
    %p119 = scmp.ne.s32.totalorder %s108, %s109
    %p120 = scmp.eq.s32.totalorder %s16, 0
    %p121 = por %p119, %p120
    %p122 = scmp.ne.s32.totalorder %s108, %s109
    %p123 = scmp.eq.s32.totalorder %s17, 1
    %p124 = por %p122, %p123
    %p126 = scmp.ne.s32.totalorder %s109, %s125
    %p127 = scmp.eq.s32.totalorder %s17, 0
    %p128 = por %p126, %p127
    %s129 = ssub.s32 %s18, %s30
    %p130 = scmp.eq.s32.totalorder %s129, 0
    %s132 = sadd.s32 %s131, 1
    %s133 = scalar_select %p130, %s131, %s132
    %p136 = pneg %p130
    %p137 = scmp.eq.s32.totalorder %s11, 1
    %p138 = por %p136, %p137
    %p139 = scmp.ne.s32.totalorder %s131, %s134
    %p140 = scmp.eq.s32.totalorder %s11, 0
    %p141 = por %p139, %p140
    %p142 = scmp.ne.s32.totalorder %s131, %s134
    %p143 = scmp.eq.s32.totalorder %s16, 1
    %p144 = por %p142, %p143
    %p145 = scmp.ne.s32.totalorder %s134, %s135
    %p146 = scmp.eq.s32.totalorder %s16, 0
    %p147 = por %p145, %p146
    %p148 = scmp.ne.s32.totalorder %s134, %s135
    %p149 = scmp.eq.s32.totalorder %s17, 1
    %p150 = por %p148, %p149
    %p152 = scmp.ne.s32.totalorder %s135, %s151
    %p153 = scmp.eq.s32.totalorder %s17, 0
    %p154 = por %p152, %p153
    %p155 = scmp.le.s32.totalorder 1, %s11
    %p156 = scmp.lt.s32.totalorder %s11, 3
    %p157 = pnand %p155, %p156
    %p158 = pneg %p157
    // Predicated region
    $region9: #{basic_block_forward.3} parent=5 // pred_check
      _
    $region10: #{basic_block_forward.3} parent=5 // pred_check_branch
      %160 = sbr.rel (%p157) target = $region12
    $region11: #{basic_block_forward.3} parent=5 // pred_region
      %s161 = ssub.s32 %s11, 1
      // Predicated region
      $region13: #{basic_block_forward.3} parent=11 // pred_check
        %p162 = pneg %p72
      $region14: #{basic_block_forward.3} parent=11 // pred_check_branch
        %164 = sbr.rel (%p162) target = $region16
      $region15: #{basic_block_forward.3} parent=11 // pred_region
        _
      $region16: #{basic_block_forward.3} parent=11 // pred_fallthru
        _
      // Predicated region
      $region17: #{basic_block_forward.3} parent=11 // pred_check
        %p165 = pneg %p93
      $region18: #{basic_block_forward.3} parent=11 // pred_check_branch
        %167 = sbr.rel (%p165) target = $region20
      $region19: #{basic_block_forward.3} parent=11 // pred_region
        _
      $region20: #{basic_block_forward.3} parent=11 // pred_fallthru
        _
    $region12: #{basic_block_forward.3} parent=5 // pred_fallthru
      _
    %p168 = scmp.lt.s32.totalorder %s11, 2
    // Predicated region
    $region21: #{basic_block_forward.3} parent=5 // pred_check
      %p169 = pneg %p168
    $region22: #{basic_block_forward.3} parent=5 // pred_check_branch
      %171 = sbr.rel (%p169) target = $region24
    $region23: #{basic_block_forward.3} parent=5 // pred_region
      // Predicated region
      $region25: #{basic_block_forward.3} parent=23 // pred_check
        %p172 = pneg %p45
      $region26: #{basic_block_forward.3} parent=23 // pred_check_branch
        %174 = sbr.rel (%p172) target = $region28
      $region27: #{basic_block_forward.3} parent=23 // pred_region
        %s175 = sadd.s32 %s18, %s19
        %s176 = smul.u32 4, %s175
        %p177 = scmp.lt.s32.totalorder %s176, 7
        %s178 = scalar_select %p177, %s176, 7
        %s179 = smul.addr %s178, 4
        %s180 = scalar_lea.vmem %s0, %s179
        %s181 = sadd.s32 %s18, %s19
        %s182 = smul.u32 4, %s181
      $region28: #{basic_block_forward.3} parent=23 // pred_fallthru
        _
    $region24: #{basic_block_forward.3} parent=5 // pred_fallthru
      _
    %p183 = scmp.le.s32.totalorder 1, %s11
    %p184 = scmp.lt.s32.totalorder %s11, 3
    %p185 = pnand %p183, %p184
    %p186 = pneg %p185
    // Predicated region
    $region29: #{basic_block_forward.3} parent=5 // pred_check
      _
    $region30: #{basic_block_forward.3} parent=5 // pred_check_branch
      %188 = sbr.rel (%p185) target = $region32
    $region31: #{basic_block_forward.3} parent=5 // pred_region
      %s189 = ssub.s32 %s11, 1
      %s190 = sadd.s32 %s20, %s21
      %s191 = smul.u32 4, %s190
      %p192 = scmp.lt.s32.totalorder %s191, 7
      %s193 = scalar_select %p192, %s191, 7
      %s194 = smul.addr %s193, 4
      %s195 = scalar_lea.vmem %s0, %s194
      %p196 = pneg %p51
      %p197 = pneg %p48
      %p198 = pneg %p72
      %p199 = pneg %p69
      %p200 = pneg %p93
      %p201 = pneg %p90
      %p202 = pneg %p121
      %p203 = pneg %p118
      %s204 = sadd.s32 %s20, %s21
      %s205 = smul.u32 4, %s204
      %p206 = scmp.lt.s32.totalorder %s205, 7
      %s207 = scalar_select %p206, %s205, 7
      %s208 = smul.addr %s207, 4
      %s209 = scalar_lea.vmem %s3, %s208
      %p210 = pneg %p147
      %p211 = pneg %p144
      %p212 = scmp.lt.s32.totalorder %s20, 1
      %s213 = scalar_select %p212, %s20, 1
      %s214 = smul.addr %s213, 8
      %s215 = scalar_lea.vmem %s4, %s214
      %s216 = sadd.s32 %s20, %s21
      %s217 = smul.u32 4, %s216
      %p218 = scmp.lt.s32.totalorder %s217, 7
      %s219 = scalar_select %p218, %s217, 7
      %s220 = smul.addr %s219, 4
      %s221 = scalar_lea.vmem %s0, %s220
      %s222 = sadd.s32 %s20, %s21
      %s223 = smul.u32 4, %s222
      %s224 = sadd.s32 %s20, %s21
      %s225 = smul.u32 4, %s224
      %p226 = scmp.lt.s32.totalorder %s225, 7
      %s227 = scalar_select %p226, %s225, 7
      %s228 = smul.addr %s227, 4
      %s229 = scalar_lea.vmem %s3, %s228
      %s230 = sadd.s32 %s20, %s21
      %s231 = smul.u32 4, %s230
      %p232 = scmp.lt.s32.totalorder %s20, 1
      %s233 = scalar_select %p232, %s20, 1
      %s234 = smul.addr %s233, 8
      %s235 = scalar_lea.vmem %s4, %s234
      %p239 = scmp.eq.s32.totalorder %s21, 0
      // Predicated region
      $region33: #{basic_block_forward.3} parent=31 // pred_check
        %p240 = pneg %p239
      $region34: #{basic_block_forward.3} parent=31 // pred_check_branch
        %242 = sbr.rel (%p240) target = $region36
      $region35: #{basic_block_forward.3} parent=31 // pred_region
        %243 = vst [vmem:[%s235] sm:$0xff] 0.0
      $region36: #{basic_block_forward.3} parent=31 // pred_fallthru
        _
      %v244 = vld [vmem:[%s221] sm:$0xf]
      %v245 = vld [vmem:[%s221 + $0x4] sm:$0xf]
      %v246 = vld [vmem:[%s221 + $0x8] sm:$0xf]
      %v247 = vld [vmem:[%s221 + $0xc] sm:$0xf]
      %v248 = vlaneseq
      %v249 = vshrl.u32 %v248, 7
      %v250 = vadd.s32 %v249, 8
      %v251 = vadd.s32 %v249, 16
      %v252 = vadd.s32 %v249, 24
      %vm253 = vcmp.lt.s32.totalorder %v249, 0
      %v254 = vsub.s32 0, %v249
      %v255 = vsel %vm253, %v254, %v249
      %v256 = vshrl.u32 %v255, 4
      %v257 = vand.u32 %v255, 15
      %v258 = vsub.s32 0, %v257
      %v259 = vsel %vm253, %v258, %v257
      %vm260 = vcmp.lt.s32.totalorder %v250, 0
      %v261 = vsub.s32 0, %v250
      %v262 = vsel %vm260, %v261, %v250
      %v263 = vshrl.u32 %v262, 4
      %v264 = vand.u32 %v262, 15
      %v265 = vsub.s32 0, %v264
      %v266 = vsel %vm260, %v265, %v264
      %vm267 = vcmp.lt.s32.totalorder %v251, 0
      %v268 = vsub.s32 0, %v251
      %v269 = vsel %vm267, %v268, %v251
      %v270 = vshrl.u32 %v269, 4
      %v271 = vand.u32 %v269, 15
      %v272 = vsub.s32 0, %v271
      %v273 = vsel %vm267, %v272, %v271
      %vm274 = vcmp.lt.s32.totalorder %v252, 0
      %v275 = vsub.s32 0, %v252
      %v276 = vsel %vm274, %v275, %v252
      %v277 = vshrl.u32 %v276, 4
      %v278 = vand.u32 %v276, 15
      %v279 = vsub.s32 0, %v278
      %v280 = vsel %vm274, %v279, %v278
      %vm281 = vcmp.ne.s32.totalorder %v259, 0
      %vm282 = vcmp.ne.s32.totalorder %v266, 0
      %vm283 = vcmp.ne.s32.totalorder %v273, 0
      %vm284 = vcmp.ne.s32.totalorder %v280, 0
      %vm285 = vcmp.lt.s32.totalorder %v259, 0
      %vm286 = vcmp.lt.s32.totalorder %v266, 0
      %vm287 = vcmp.lt.s32.totalorder %v273, 0
      %vm288 = vcmp.lt.s32.totalorder %v280, 0
      %vm289 = vmand %vm285, %vm281
      %vm290 = vmand %vm286, %vm282
      %vm291 = vmand %vm287, %vm283
      %vm292 = vmand %vm288, %vm284
      %v293 = vadd.s32 %v259, 16
      %v294 = vadd.s32 %v266, 16
      %v295 = vadd.s32 %v273, 16
      %v296 = vadd.s32 %v280, 16
      %v297 = vsel %vm289, %v293, %v259
      %v298 = vsel %vm290, %v294, %v266
      %v299 = vsel %vm291, %v295, %v273
      %v300 = vsel %vm292, %v296, %v280
      %vm301 = vcmp.eq.s32.totalorder %v297, 0
      %vm302 = vcmp.eq.s32.totalorder %v298, 0
      %vm303 = vcmp.eq.s32.totalorder %v299, 0
      %vm304 = vcmp.eq.s32.totalorder %v300, 0
      %v309 = vunpack.c.l.b16 %v244
      %v310 = vunpack.c.l.b16 %v245
      %v311 = vunpack.c.l.b16 %v246
      %v312 = vunpack.c.l.b16 %v247
      %v313 = vpack.c.b16 %v310, %v309
      %v314 = vpack.c.b16 %v312, %v311
      %vm315 = vsmask.f32 256
      %v317 = vshrl.u32 %v313, 16
      %v319 = vrot.slane %v317, 7
      %v320 = vshll.u32 %v313, 16
      %v322 = vor.u32 %v319, %v320
      %v324 = vshrl.u32 %v314, 16
      %v326 = vrot.slane %v324, 7
      %v327 = vshll.u32 %v314, 16
      %v329 = vor.u32 %v326, %v327
      %v330 = vsel %vm315, %v319, %v329
      %vm333 = vcmask 1040384
      %vm334 = vmand %vm333, %vm315
      %v335 = vsel %vm334, 0, %v322
      %v336 = vsel %vm301, 1, 0
      %v337 = vsel %vm302, 1, 0
      %v338 = vsel %vm303, 1, 0
      %v339 = vsel %vm304, 1, 0
      %vm340 = vcmp.eq.s32.totalorder %v336, 1
      %vm341 = vcmp.eq.s32.totalorder %v337, 1
      %vm342 = vcmp.eq.s32.totalorder %v338, 1
      %vm343 = vcmp.eq.s32.totalorder %v339, 1
      %vm344 = vmpackc.low %vm340, %vm340
      %vm345 = vmpackc.low %vm341, %vm341
      %vm346 = vmpackc.low %vm342, %vm342
      %vm347 = vmpackc.low %vm343, %vm343
      %v348 = vsel %vm344, 65537, 0
      %v349 = vsel %vm345, 65537, 0
      %v350 = vsel %vm346, 65537, 0
      %v351 = vsel %vm347, 65537, 0
      %v352 = vunpack.c.l.b16 %v348
      %v353 = vunpack.c.l.b16 %v349
      %v354 = vunpack.c.l.b16 %v350
      %v355 = vunpack.c.l.b16 %v351
      %v356 = vpack.c.b16 %v353, %v352
      %v357 = vpack.c.b16 %v355, %v354
      %vm358 = vcmp.ne.s16.totalorder %v356, 0
      %vm359 = vcmp.ne.s16.totalorder %v357, 0
      %v360 = vsel %vm358, 0, %v335
      %v361 = vsel %vm359, 0, %v330
      %vm362 = vcmp.eq.s32.totalorder %v297, 15
      %vm363 = vcmp.eq.s32.totalorder %v298, 15
      %vm364 = vcmp.eq.s32.totalorder %v299, 15
      %vm365 = vcmp.eq.s32.totalorder %v300, 15
      %vm366 = vsmask.f32 7424
      %v367 = vrot.slane %v320, 1
      %v368 = vor.u32 %v317, %v367
      %v369 = vrot.slane %v327, 1
      %v370 = vsel %vm366, %v368, %v369
      %v371 = vor.u32 %v324, %v369
      %vm374 = vcmask 1047552
      %vm375 = vmand %vm374, %vm366
      %v376 = vsel %vm375, %v371, 0
      %v377 = vsel %vm362, 1, 0
      %v378 = vsel %vm363, 1, 0
      %v379 = vsel %vm364, 1, 0
      %v380 = vsel %vm365, 1, 0
      %vm381 = vcmp.eq.s32.totalorder %v377, 1
      %vm382 = vcmp.eq.s32.totalorder %v378, 1
      %vm383 = vcmp.eq.s32.totalorder %v379, 1
      %vm384 = vcmp.eq.s32.totalorder %v380, 1
      %vm385 = vmpackc.low %vm381, %vm381
      %vm386 = vmpackc.low %vm382, %vm382
      %vm387 = vmpackc.low %vm383, %vm383
      %vm388 = vmpackc.low %vm384, %vm384
      %v389 = vsel %vm385, 65537, 0
      %v390 = vsel %vm386, 65537, 0
      %v391 = vsel %vm387, 65537, 0
      %v392 = vsel %vm388, 65537, 0
      %v393 = vunpack.c.l.b16 %v389
      %v394 = vunpack.c.l.b16 %v390
      %v395 = vunpack.c.l.b16 %v391
      %v396 = vunpack.c.l.b16 %v392
      %v397 = vpack.c.b16 %v394, %v393
      %v398 = vpack.c.b16 %v396, %v395
      %vm399 = vcmp.ne.s16.totalorder %v397, 0
      %vm400 = vcmp.ne.s16.totalorder %v398, 0
      %v401 = vsel %vm399, 0, %v370
      %v402 = vsel %vm400, 0, %v376
      %v405 = vld [vmem:[%s1] sm:$0xf]
      %v406 = vld [vmem:[%s1 + $0x4] sm:$0xf]
      %v407 = vld [vmem:[%s1 + $0x8] sm:$0xf]
      %v408 = vld [vmem:[%s1 + $0xc] sm:$0xf]
      %v409 = vld [vmem:[%s1 + $0x10] sm:$0xf]
      %v410 = vld [vmem:[%s1 + $0x14] sm:$0xf]
      %v411 = vld [vmem:[%s1 + $0x18] sm:$0xf]
      %v412 = vld [vmem:[%s1 + $0x1c] sm:$0xf]
      %v413 = vld [vmem:[%s1 + $0x20] sm:$0xf]
      %v414 = vld [vmem:[%s1 + $0x24] sm:$0xf]
      %v415 = vld [vmem:[%s1 + $0x28] sm:$0xf]
      %v416 = vld [vmem:[%s1 + $0x2c] sm:$0xf]
      %v417 = vld [vmem:[%s1 + $0x30] sm:$0xf]
      %v418 = vld [vmem:[%s1 + $0x34] sm:$0xf]
      %v419 = vld [vmem:[%s1 + $0x38] sm:$0xf]
      %v420 = vld [vmem:[%s1 + $0x3c] sm:$0xf]
      %v421 = vld [vmem:[%s1 + $0x40] sm:$0xf]
      %v422 = vld [vmem:[%s1 + $0x44] sm:$0xf]
      %v423 = vld [vmem:[%s1 + $0x48] sm:$0xf]
      %v424 = vld [vmem:[%s1 + $0x4c] sm:$0xf]
      %v425 = vld [vmem:[%s1 + $0x50] sm:$0xf]
      %v426 = vld [vmem:[%s1 + $0x54] sm:$0xf]
      %v427 = vld [vmem:[%s1 + $0x58] sm:$0xf]
      %v428 = vld [vmem:[%s1 + $0x5c] sm:$0xf]
      %v429 = vld [vmem:[%s1 + $0x60] sm:$0xf]
      %v430 = vld [vmem:[%s1 + $0x64] sm:$0xf]
      %v431 = vld [vmem:[%s1 + $0x68] sm:$0xf]
      %v432 = vld [vmem:[%s1 + $0x6c] sm:$0xf]
      %v433 = vld [vmem:[%s1 + $0x70] sm:$0xf]
      %v434 = vld [vmem:[%s1 + $0x74] sm:$0xf]
      %v435 = vld [vmem:[%s1 + $0x78] sm:$0xf]
      %v436 = vld [vmem:[%s1 + $0x7c] sm:$0xf]
      %v437 = vld [vmem:[%s1 + $0x80] sm:$0xf]
      %v438 = vld [vmem:[%s1 + $0x84] sm:$0xf]
      %v439 = vld [vmem:[%s1 + $0x88] sm:$0xf]
      %v440 = vld [vmem:[%s1 + $0x8c] sm:$0xf]
      %v441 = vld [vmem:[%s1 + $0x90] sm:$0xf]
      %v442 = vld [vmem:[%s1 + $0x94] sm:$0xf]
      %v443 = vld [vmem:[%s1 + $0x98] sm:$0xf]
      %v444 = vld [vmem:[%s1 + $0x9c] sm:$0xf]
      %v445 = vld [vmem:[%s1 + $0xa0] sm:$0xf]
      %v446 = vld [vmem:[%s1 + $0xa4] sm:$0xf]
      %v447 = vld [vmem:[%s1 + $0xa8] sm:$0xf]
      %v448 = vld [vmem:[%s1 + $0xac] sm:$0xf]
      %v449 = vld [vmem:[%s1 + $0xb0] sm:$0xf]
      %v450 = vld [vmem:[%s1 + $0xb4] sm:$0xf]
      %v451 = vld [vmem:[%s1 + $0xb8] sm:$0xf]
      %v452 = vld [vmem:[%s1 + $0xbc] sm:$0xf]
      %v501 = vunpack.c.l.b16 %v405
      %v502 = vunpack.c.l.b16 %v406
      %v503 = vunpack.c.l.b16 %v407
      %v504 = vunpack.c.l.b16 %v408
      %v505 = vunpack.c.l.b16 %v409
      %v506 = vunpack.c.l.b16 %v410
      %v507 = vunpack.c.l.b16 %v411
      %v508 = vunpack.c.l.b16 %v412
      %v509 = vunpack.c.l.b16 %v413
      %v510 = vunpack.c.l.b16 %v414
      %v511 = vunpack.c.l.b16 %v415
      %v512 = vunpack.c.l.b16 %v416
      %v513 = vunpack.c.l.b16 %v417
      %v514 = vunpack.c.l.b16 %v418
      %v515 = vunpack.c.l.b16 %v419
      %v516 = vunpack.c.l.b16 %v420
      %v517 = vunpack.c.l.b16 %v421
      %v518 = vunpack.c.l.b16 %v422
      %v519 = vunpack.c.l.b16 %v423
      %v520 = vunpack.c.l.b16 %v424
      %v521 = vunpack.c.l.b16 %v425
      %v522 = vunpack.c.l.b16 %v426
      %v523 = vunpack.c.l.b16 %v427
      %v524 = vunpack.c.l.b16 %v428
      %v525 = vunpack.c.l.b16 %v429
      %v526 = vunpack.c.l.b16 %v430
      %v527 = vunpack.c.l.b16 %v431
      %v528 = vunpack.c.l.b16 %v432
      %v529 = vunpack.c.l.b16 %v433
      %v530 = vunpack.c.l.b16 %v434
      %v531 = vunpack.c.l.b16 %v435
      %v532 = vunpack.c.l.b16 %v436
      %v533 = vunpack.c.l.b16 %v437
      %v534 = vunpack.c.l.b16 %v438
      %v535 = vunpack.c.l.b16 %v439
      %v536 = vunpack.c.l.b16 %v440
      %v537 = vunpack.c.l.b16 %v441
      %v538 = vunpack.c.l.b16 %v442
      %v539 = vunpack.c.l.b16 %v443
      %v540 = vunpack.c.l.b16 %v444
      %v541 = vunpack.c.l.b16 %v445
      %v542 = vunpack.c.l.b16 %v446
      %v543 = vunpack.c.l.b16 %v447
      %v544 = vunpack.c.l.b16 %v448
      %v545 = vunpack.c.l.b16 %v449
      %v546 = vunpack.c.l.b16 %v450
      %v547 = vunpack.c.l.b16 %v451
      %v548 = vunpack.c.l.b16 %v452
      %v549 = vpack.c.b16 %v502, %v501
      %v550 = vpack.c.b16 %v504, %v503
      %v551 = vpack.c.b16 %v506, %v505
      %v552 = vpack.c.b16 %v508, %v507
      %v553 = vpack.c.b16 %v510, %v509
      %v554 = vpack.c.b16 %v512, %v511
      %v555 = vpack.c.b16 %v514, %v513
      %v556 = vpack.c.b16 %v516, %v515
      %v557 = vpack.c.b16 %v518, %v517
      %v558 = vpack.c.b16 %v520, %v519
      %v559 = vpack.c.b16 %v522, %v521
      %v560 = vpack.c.b16 %v524, %v523
      %v561 = vpack.c.b16 %v526, %v525
      %v562 = vpack.c.b16 %v528, %v527
      %v563 = vpack.c.b16 %v530, %v529
      %v564 = vpack.c.b16 %v532, %v531
      %v565 = vpack.c.b16 %v534, %v533
      %v566 = vpack.c.b16 %v536, %v535
      %v567 = vpack.c.b16 %v538, %v537
      %v568 = vpack.c.b16 %v540, %v539
      %v569 = vpack.c.b16 %v542, %v541
      %v570 = vpack.c.b16 %v544, %v543
      %v571 = vpack.c.b16 %v546, %v545
      %v572 = vpack.c.b16 %v548, %v547
      %597 = vmatprep.subr.bf16.mxu0 0
      %598 = vmatpush1.bf16.msra.mxu0 %v549
      %599 = vmatprep.subr.bf16.mxu0 0
      %600 = vmatpush1.bf16.msra.mxu0 %v550
      %601 = vmatprep.subr.bf16.mxu0 0
      %602 = vmatpush1.bf16.msra.mxu0 %v551
      %603 = vmatprep.subr.bf16.mxu0 0
      %604 = vmatpush1.bf16.msra.mxu0 %v552
      %605 = vmatprep.subr.bf16.mxu0 0
      %606 = vmatpush1.bf16.msra.mxu0 %v553
      %607 = vmatprep.subr.bf16.mxu0 0
      %608 = vmatpush1.bf16.msra.mxu0 %v554
      %609 = vmatprep.subr.bf16.mxu0 0
      %610 = vmatpush1.bf16.msra.mxu0 %v555
      %611 = vmatprep.subr.bf16.mxu0 0
      %612 = vmatpush1.bf16.msra.mxu0 %v556
      %613 = vmatprep.subr.bf16.mxu0 0
      %614 = vmatpush1.bf16.msra.mxu0 %v557
      %615 = vmatprep.subr.bf16.mxu0 0
      %616 = vmatpush1.bf16.msra.mxu0 %v558
      %617 = vmatprep.subr.bf16.mxu0 0
      %618 = vmatpush1.bf16.msra.mxu0 %v559
      %619 = vmatprep.subr.bf16.mxu0 0
      %620 = vmatpush1.bf16.msra.mxu0 %v560
      %621 = vmatprep.subr.bf16.mxu0 0
      %622 = vmatpush1.bf16.msra.mxu0 %v561
      %623 = vmatprep.subr.bf16.mxu0 0
      %624 = vmatpush1.bf16.msra.mxu0 %v562
      %625 = vmatprep.subr.bf16.mxu0 0
      %626 = vmatpush1.bf16.msra.mxu0 %v563
      %627 = vmatprep.subr.bf16.mxu0 0
      %628 = vmatpush1.bf16.msra.mxu0 %v564
      %629 = vmatprep.mubr.bf16.mxu0 %v313
      %630 = vmatmul.mubr.bf16.gmra.mrb[0].mxu0 %v360
      %v631 = vpop.f32.mrb[0].mxu0
      %v632 = vadd.f32 0.0, %v631
      %v633 = vpop.f32.mrb[0].mxu0
      %v634 = vpop.f32.mrb[0].mxu0
      %v635 = vadd.f32 0.0, %v634
      %v636 = vpop.f32.mrb[0].mxu0
      %637 = vmatprep.mubr.bf16.mxu0 %v314
      %638 = vmatmul.mubr.bf16.gmra.mrb[0].mxu0 %v361
      %v639 = vpop.f32.mrb[0].mxu0
      %v640 = vadd.f32 0.0, %v639
      %v641 = vpop.f32.mrb[0].mxu0
      %v642 = vpop.f32.mrb[0].mxu0
      %v643 = vadd.f32 0.0, %v642
      %v644 = vpop.f32.mrb[0].mxu0
      %645 = vdwg.mxu0
      %646 = vmatprep.subr.bf16.mxu0 0
      %647 = vmatpush1.bf16.msra.mxu0 %v565
      %648 = vmatprep.subr.bf16.mxu0 0
      %649 = vmatpush1.bf16.msra.mxu0 %v566
      %650 = vmatprep.subr.bf16.mxu0 0
      %651 = vmatpush1.bf16.msra.mxu0 %v567
      %652 = vmatprep.subr.bf16.mxu0 0
      %653 = vmatpush1.bf16.msra.mxu0 %v568
      %654 = vmatprep.subr.bf16.mxu0 0
      %655 = vmatpush1.bf16.msra.mxu0 %v569
      %656 = vmatprep.subr.bf16.mxu0 0
      %657 = vmatpush1.bf16.msra.mxu0 %v570
      %658 = vmatprep.subr.bf16.mxu0 0
      %659 = vmatpush1.bf16.msra.mxu0 %v571
      %660 = vmatprep.subr.bf16.mxu0 0
      %661 = vmatpush1.bf16.msra.mxu0 %v572
      %662 = vmatprep.subr.bf16.mxu0 0
      %663 = vmatpush1.bf16.msra.mxu0 0
      %664 = vmatprep.subr.bf16.mxu0 0
      %665 = vmatpush1.bf16.msra.mxu0 0
      %666 = vmatprep.subr.bf16.mxu0 0
      %667 = vmatpush1.bf16.msra.mxu0 0
      %668 = vmatprep.subr.bf16.mxu0 0
      %669 = vmatpush1.bf16.msra.mxu0 0
      %670 = vmatprep.subr.bf16.mxu0 0
      %671 = vmatpush1.bf16.msra.mxu0 0
      %672 = vmatprep.subr.bf16.mxu0 0
      %673 = vmatpush1.bf16.msra.mxu0 0
      %674 = vmatprep.subr.bf16.mxu0 0
      %675 = vmatpush1.bf16.msra.mxu0 0
      %676 = vmatprep.subr.bf16.mxu0 0
      %677 = vmatpush1.bf16.msra.mxu0 0
      %678 = vmatprep.mubr.bf16.mxu0 0
      %679 = vmatmul.mubr.bf16.gmra.mrb[0].mxu0 %v401
      %v680 = vpop.f32.mrb[0].mxu0
      %v681 = vadd.f32 %v632, %v680
      %v682 = vpop.f32.mrb[0].mxu0
      %v683 = vpop.f32.mrb[0].mxu0
      %v684 = vadd.f32 %v635, %v683
      %v685 = vpop.f32.mrb[0].mxu0
      %686 = vmatprep.mubr.bf16.mxu0 0
      %687 = vmatmul.mubr.bf16.gmra.mrb[0].mxu0 %v402
      %v688 = vpop.f32.mrb[0].mxu0
      %v689 = vadd.f32 %v640, %v688
      %v690 = vpop.f32.mrb[0].mxu0
      %v691 = vpop.f32.mrb[0].mxu0
      %v692 = vadd.f32 %v643, %v691
      %v693 = vpop.f32.mrb[0].mxu0
      %694 = vdwg.mxu0
      %v695 = vld [vmem:[%s2] sm:$0xf]
      %v696 = vld [vmem:[%s2 + $0x4] sm:$0xf]
      %v697 = vld [vmem:[%s2 + $0x8] sm:$0xf]
      %v698 = vld [vmem:[%s2 + $0xc] sm:$0xf]
      %v699 = vld [vmem:[%s2 + $0x10] sm:$0xf]
      %v700 = vld [vmem:[%s2 + $0x14] sm:$0xf]
      %v701 = vld [vmem:[%s2 + $0x18] sm:$0xf]
      %v702 = vld [vmem:[%s2 + $0x1c] sm:$0xf]
      %v703 = vld [vmem:[%s2 + $0x20] sm:$0xf]
      %v704 = vld [vmem:[%s2 + $0x24] sm:$0xf]
      %v705 = vld [vmem:[%s2 + $0x28] sm:$0xf]
      %v706 = vld [vmem:[%s2 + $0x2c] sm:$0xf]
      %v707 = vld [vmem:[%s2 + $0x30] sm:$0xf]
      %v708 = vld [vmem:[%s2 + $0x34] sm:$0xf]
      %v709 = vld [vmem:[%s2 + $0x38] sm:$0xf]
      %v710 = vld [vmem:[%s2 + $0x3c] sm:$0xf]
      %v727 = vunpack.c.l.b16 %v695
      %v728 = vunpack.c.l.b16 %v696
      %v729 = vunpack.c.l.b16 %v697
      %v730 = vunpack.c.l.b16 %v698
      %v731 = vunpack.c.l.b16 %v699
      %v732 = vunpack.c.l.b16 %v700
      %v733 = vunpack.c.l.b16 %v701
      %v734 = vunpack.c.l.b16 %v702
      %v735 = vunpack.c.l.b16 %v703
      %v736 = vunpack.c.l.b16 %v704
      %v737 = vunpack.c.l.b16 %v705
      %v738 = vunpack.c.l.b16 %v706
      %v739 = vunpack.c.l.b16 %v707
      %v740 = vunpack.c.l.b16 %v708
      %v741 = vunpack.c.l.b16 %v709
      %v742 = vunpack.c.l.b16 %v710
      %v743 = vpack.c.b16 %v728, %v727
      %v744 = vpack.c.b16 %v730, %v729
      %v745 = vpack.c.b16 %v732, %v731
      %v746 = vpack.c.b16 %v734, %v733
      %v747 = vpack.c.b16 %v736, %v735
      %v748 = vpack.c.b16 %v738, %v737
      %v749 = vpack.c.b16 %v740, %v739
      %v750 = vpack.c.b16 %v742, %v741
      %759 = vmatprep.subr.bf16.mxu0 0
      %760 = vmatpush1.bf16.msra.mxu0 %v743
      %761 = vmatprep.subr.bf16.mxu0 0
      %762 = vmatpush1.bf16.msra.mxu0 %v744
      %763 = vmatprep.subr.bf16.mxu0 0
      %764 = vmatpush1.bf16.msra.mxu0 %v745
      %765 = vmatprep.subr.bf16.mxu0 0
      %766 = vmatpush1.bf16.msra.mxu0 %v746
      %767 = vmatprep.subr.bf16.mxu0 0
      %768 = vmatpush1.bf16.msra.mxu0 %v747
      %769 = vmatprep.subr.bf16.mxu0 0
      %770 = vmatpush1.bf16.msra.mxu0 %v748
      %771 = vmatprep.subr.bf16.mxu0 0
      %772 = vmatpush1.bf16.msra.mxu0 %v749
      %773 = vmatprep.subr.bf16.mxu0 0
      %774 = vmatpush1.bf16.msra.mxu0 %v750
      %775 = vmatprep.subr.bf16.mxu0 0
      %776 = vmatpush1.bf16.msra.mxu0 0
      %777 = vmatprep.subr.bf16.mxu0 0
      %778 = vmatpush1.bf16.msra.mxu0 0
      %779 = vmatprep.subr.bf16.mxu0 0
      %780 = vmatpush1.bf16.msra.mxu0 0
      %781 = vmatprep.subr.bf16.mxu0 0
      %782 = vmatpush1.bf16.msra.mxu0 0
      %783 = vmatprep.subr.bf16.mxu0 0
      %784 = vmatpush1.bf16.msra.mxu0 0
      %785 = vmatprep.subr.bf16.mxu0 0
      %786 = vmatpush1.bf16.msra.mxu0 0
      %787 = vmatprep.subr.bf16.mxu0 0
      %788 = vmatpush1.bf16.msra.mxu0 0
      %789 = vmatprep.subr.bf16.mxu0 0
      %790 = vmatpush1.bf16.msra.mxu0 0
      %791 = vmatprep.mubr.bf16.mxu0 0
      %792 = vmatmul.mubr.bf16.gmra.mrb[0].mxu0 %v313
      %v793 = vpop.f32.mrb[0].mxu0
      %v794 = vadd.f32 0.0, %v793
      %v795 = vpop.f32.mrb[0].mxu0
      %v796 = vpop.f32.mrb[0].mxu0
      %v797 = vadd.f32 0.0, %v796
      %v798 = vpop.f32.mrb[0].mxu0
      %799 = vmatprep.mubr.bf16.mxu0 0
      %800 = vmatmul.mubr.bf16.gmra.mrb[0].mxu0 %v314
      %v801 = vpop.f32.mrb[0].mxu0
      %v802 = vadd.f32 0.0, %v801
      %v803 = vpop.f32.mrb[0].mxu0
      %v804 = vpop.f32.mrb[0].mxu0
      %v805 = vadd.f32 0.0, %v804
      %v806 = vpop.f32.mrb[0].mxu0
      %807 = vdwg.mxu0
      %v808 = vpack.c.bf16 %v684, %v681
      %v809 = vpack.c.bf16 %v692, %v689
      %v812 = vunpack.c.l.b16 %v808
      %v813 = vunpack.c.h.b16 %v808
      %v814 = vunpack.c.l.b16 %v809
      %v815 = vunpack.c.h.b16 %v809
      %v816 = vpack.c.b16 %v812, %v812
      %v817 = vpack.c.b16 %v813, %v813
      %v818 = vpack.c.b16 %v814, %v814
      %v819 = vpack.c.b16 %v815, %v815
      %824 = vst [vmem:[%s229] sm:$0xf] %v816
      %825 = vst [vmem:[%s229 + $0x4] sm:$0xf] %v817
      %826 = vst [vmem:[%s229 + $0x8] sm:$0xf] %v818
      %827 = vst [vmem:[%s229 + $0xc] sm:$0xf] %v819
      %v828 = vld [vmem:[%s235] sm:$0xf]
      %v829 = vadd.f32 %v681, %v684
      %v830 = vadd.f32 %v829, %v689
      %v831 = vadd.f32 %v830, %v692
      %v832 = vrot.slane %v831, 4
      %v833 = vadd.f32 %v831, %v832
      %v834 = vrot.slane %v833, 2
      %v835 = vadd.f32 %v833, %v834
      %v836 = vrot.slane %v835, 1
      %v837 = vadd.f32 %v835, %v836
      %v838 = vmul.f32 %v681, %v681
      %v839 = vmul.f32 %v684, %v684
      %v840 = vmul.f32 %v689, %v689
      %v841 = vmul.f32 %v692, %v692
      %v842 = vadd.f32 %v838, %v839
      %v843 = vadd.f32 %v842, %v840
      %v844 = vadd.f32 %v843, %v841
      %v845 = vrot.slane %v844, 4
      %v846 = vadd.f32 %v844, %v845
      %v847 = vrot.slane %v846, 2
      %v848 = vadd.f32 %v846, %v847
      %v849 = vrot.slane %v848, 1
      %v850 = vadd.f32 %v848, %v849
      %v851 = vadd.f32 %v794, %v797
      %v852 = vadd.f32 %v851, %v802
      %v853 = vadd.f32 %v852, %v805
      %v854 = vrot.slane %v853, 4
      %v855 = vadd.f32 %v853, %v854
      %v856 = vrot.slane %v855, 2
      %v857 = vadd.f32 %v855, %v856
      %v858 = vrot.slane %v857, 1
      %v859 = vadd.f32 %v857, %v858
      %v860 = vmul.f32 %v794, %v794
      %v861 = vmul.f32 %v797, %v797
      %v862 = vmul.f32 %v802, %v802
      %v863 = vmul.f32 %v805, %v805
      %v864 = vadd.f32 %v860, %v861
      %v865 = vadd.f32 %v864, %v862
      %v866 = vadd.f32 %v865, %v863
      %v867 = vrot.slane %v866, 4
      %v868 = vadd.f32 %v866, %v867
      %v869 = vrot.slane %v868, 2
      %v870 = vadd.f32 %v868, %v869
      %v871 = vrot.slane %v870, 1
      %v872 = vadd.f32 %v870, %v871
      %vm873 = vcmask 1040384
      %v874 = vsel %vm873, %v837, %v850
      %vm875 = vcmask 1041408
      %v876 = vsel %vm875, %v874, %v859
      %vm877 = vcmask 1042432
      %v878 = vsel %vm877, %v876, %v872
      %v879 = vadd.f32 %v828, %v878
      %880 = vst [vmem:[%s235] sm:$0xf] %v879
      %s881 = sadd.s32 %s20, %s21
      %s882 = smul.u32 4, %s881
      %p883 = scmp.lt.s32.totalorder %s882, 7
      %s884 = scalar_select %p883, %s882, 7
      %s885 = smul.addr %s884, 4
      %s886 = scalar_lea.vmem %s3, %s885
      %p887 = scmp.lt.s32.totalorder %s20, 1
      %s888 = scalar_select %p887, %s20, 1
      %s889 = smul.addr %s888, 8
      %s890 = scalar_lea.vmem %s4, %s889
      // Predicated region
      $region37: #{basic_block_forward.3} parent=31 // pred_check
        %p891 = pneg %p118
      $region38: #{basic_block_forward.3} parent=31 // pred_check_branch
        %893 = sbr.rel (%p891) target = $region40
      $region39: #{basic_block_forward.3} parent=31 // pred_region
        %s894 = sadd.s32 %s20, %s21
        %s895 = smul.u32 4, %s894
      $region40: #{basic_block_forward.3} parent=31 // pred_fallthru
        _
      // Predicated region
      $region41: #{basic_block_forward.3} parent=31 // pred_check
        %p896 = pneg %p144
      $region42: #{basic_block_forward.3} parent=31 // pred_check_branch
        %898 = sbr.rel (%p896) target = $region44
      $region43: #{basic_block_forward.3} parent=31 // pred_region
        _
      $region44: #{basic_block_forward.3} parent=31 // pred_fallthru
        _
    $region32: #{basic_block_forward.3} parent=5 // pred_fallthru
      _
    %p899 = scmp.le.s32.totalorder 2, %s11
    // Predicated region
    $region45: #{basic_block_forward.3} parent=5 // pred_check
      %p900 = pneg %p899
    $region46: #{basic_block_forward.3} parent=5 // pred_check_branch
      %902 = sbr.rel (%p900) target = $region48
    $region47: #{basic_block_forward.3} parent=5 // pred_region
      %s903 = ssub.s32 %s11, 2
      // Predicated region
      $region49: #{basic_block_forward.3} parent=47 // pred_check
        %p904 = pneg %p124
      $region50: #{basic_block_forward.3} parent=47 // pred_check_branch
        %906 = sbr.rel (%p904) target = $region52
      $region51: #{basic_block_forward.3} parent=47 // pred_region
        %s907 = sadd.s32 %s22, %s23
        %s908 = smul.u32 4, %s907
        %p909 = scmp.lt.s32.totalorder %s908, 7
        %s910 = scalar_select %p909, %s908, 7
        %s911 = smul.addr %s910, 4
        %s912 = scalar_lea.vmem %s3, %s911
      $region52: #{basic_block_forward.3} parent=47 // pred_fallthru
        _
      // Predicated region
      $region53: #{basic_block_forward.3} parent=47 // pred_check
        %p913 = pneg %p150
      $region54: #{basic_block_forward.3} parent=47 // pred_check_branch
        %915 = sbr.rel (%p913) target = $region56
      $region55: #{basic_block_forward.3} parent=47 // pred_region
        %p916 = scmp.lt.s32.totalorder %s22, 1
        %s917 = scalar_select %p916, %s22, 1
        %s918 = smul.addr %s917, 8
        %s919 = scalar_lea.vmem %s4, %s918
      $region56: #{basic_block_forward.3} parent=47 // pred_fallthru
        _
    $region48: #{basic_block_forward.3} parent=5 // pred_fallthru
      _
  $region6: #{basic_block_forward.3} parent=0 // loop_footer
    %s15 = sadd.s32 1, %s11
  $region7: #{basic_block_forward.3} parent=0 // loop_footer_branch
    %10 = sbr.rel target = $region3
  $region8: #{basic_block_forward.3} parent=0 // loop_exit
    _

</llo_original>
